<compile_context>
chip_gen: v7x
topology: tpu7x:2x2x1
jax: 0.10.0
libtpu: 0.0.40
codegen_flags: <defaults>
</compile_context>

<pallas_src>
import numpy as np
import jax
import jax.numpy as jnp
from jax.experimental import pallas as pl
from jax.experimental.pallas import tpu as pltpu

NUM_JOINTS = 24
DIM = 256
IN_CH = 3
GROUP = 8  # batches mixed per kron-matmul (K = 8*24 = 192 <= 256 -> one K tile)


def get_smpl_skeleton():
    return np.array([[0, 1], [0, 2], [0, 3], [1, 4], [2, 5], [3, 6], [4, 7],
                     [5, 8], [6, 9], [7, 10], [8, 11], [9, 12], [9, 13],
                     [9, 14], [12, 15], [13, 16], [14, 17], [16, 18],
                     [17, 19], [18, 20], [19, 21], [20, 22], [21, 23]])


def get_smpl_adj():
    skeleton = get_smpl_skeleton()
    num_joint = len(skeleton) + 1
    adj = np.zeros((num_joint, num_joint))
    for r, c in skeleton:
        adj[r, c] = 1.0
        adj[c, r] = 1.0
    for i in range(len(adj)):
        adj[i, i] = 1.0
    adj = adj / (np.sum(adj, axis=0, keepdims=True) + 1e-09)
    return adj


def _gcn_kernel(xm_ref, w1_ref, b1_ref, w2_ref, b2_ref, w3_ref, b3_ref,
                kron_ref, o_ref):
    """GCN forward on one (BT, 24, C) batch tile (joints on sublanes,
    channels lane-dense).

    xm_ref:   (BT, 24, 3)   f32   input with the layer-1 joint mix pre-applied
    w1_ref:   (3, 256)      f32   Conv1d(k=1) weight (right-matmul form)
    b1_ref:   (1, 256)      f32
    w2/w3:    (256, 256)    bf16
    b2/b3:    (1, 256)      f32
    kron_ref: (192, 192)    bf16  I_8 (x) adjT  (joint mix for 8 batches at once)
    o_ref:    (BT, 24, 256) f32
    """
    bt = xm_ref.shape[0]
    n_groups = bt // GROUP
    rows = GROUP * NUM_JOINTS  # 192 flat rows per mix group

    # ---- Layer 1:  relu((adjT @ x) @ W1 + b1) ----
    # The joint mix of the 3-channel input was hoisted to the wrapper (exact
    # reorder: adj is column-normalized so rows of adjT sum to ~1 and the conv
    # bias commutes through the mix; would break for e.g. D^-1/2 A D^-1/2).
    # The K=3 projection is three broadcast FMAs on the VPU (kept in f32: v5e's
    # VPU has no bf16, and this sits under MXU slack anyway).
    xm = xm_ref[...]                                    # (BT, 24, 3)
    w1 = w1_ref[...]                                    # (3, 256)
    h = (xm[:, :, 0:1] * w1[0:1, :]
         + xm[:, :, 1:2] * w1[1:2, :]
         + xm[:, :, 2:3] * w1[2:3, :]
         + b1_ref[...])                                 # (BT, 24, 256)
    h = jnp.maximum(h, 0.0)
    # (BT, 24, 256) -> (BT*24, 256) is sublane-contiguous (24 % 8 == 0): free.
    h = h.reshape(bt * NUM_JOINTS, DIM)

    kron = kron_ref[...]                                # (192, 192) bf16

    # ---- Layers 2 & 3:  relu(adjT @ (h @ W + b)) ----
    def layer(hflat, w_ref, b_ref):
        # Channel projection: batch*joints folded into the MXU M axis, bf16
        # operands with f32 accumulation (~3-4x MXU throughput vs f32 operands).
        y = jnp.dot(hflat.astype(jnp.bfloat16), w_ref[...],
                    preferred_element_type=jnp.float32)
        y = (y + b_ref[...]).astype(jnp.bfloat16)       # (BT*24, 256)

        # Joint mix: instead of BT tiny (24,24)x(24,256) matmuls (the old
        # batched einsum), mix 8 batches per matmul with the constant
        # block-diagonal kron = I_8 (x) adjT.  Per group: M=192, K=192, N=256
        # -> 3 MXU row-passes per batch (same as the single (24, BT*256)
        # formulation) with no lane-relayout reshapes/transposes and 8x fewer
        # matmul boundaries than the batched form.
        z = [jnp.dot(kron, y[g * rows:(g + 1) * rows, :],
                     preferred_element_type=jnp.float32)
             for g in range(n_groups)]
        z = z[0] if n_groups == 1 else jnp.concatenate(z, axis=0)
        return jnp.maximum(z, 0.0)                      # (BT*24, 256) f32

    h = layer(h, w2_ref, b2_ref)
    h = layer(h, w3_ref, b3_ref)
    o_ref[...] = h.reshape(bt, NUM_JOINTS, DIM)         # lane-dense 256-wide out


def _round_up(x, m):
    return ((x + m - 1) // m) * m


def _choose_bt(B):
    """Batch-tile size.

    24 joints sit on sublanes inside a block, so any BT that is a multiple of 8
    keeps the (BT,24,256)->(BT*24,256) reshape free and the mix grouping exact;
    multiples of 16 make M = 24*BT a multiple of 128 (v5e MXU alignment).
    Large BT amortizes the ~0.35us per-grid-step overhead; the 128 cap keeps the
    per-step VMEM footprint ~20 MB (comfortably inside v7x's 64 MiB).  B is
    padded up to a multiple of BT in the wrapper, so no divisor constraint.
    """
    if B <= 16:
        return _round_up(B, 8)                    # one small step
    return min(128, _round_up(-(-B // 2), 16))    # >= 2 steps for megacore / v7x


def gcn_forward(x_ncl, params, channels_last=False):
    """x_ncl: (B, 3, 24) float32.

    Returns (B, 256, 24) (PyTorch layout) by default; pass channels_last=True
    to get the kernel-native lane-dense (B, 24, 256) output and skip the extra
    HBM pass of the final transpose when the consumer accepts NLC layout."""
    B = x_ncl.shape[0]
    adjT = params["adjT"]                               # (24, 24) f32

    # Layer-1 joint mix hoisted out of the kernel (tiny: B*24*3 elements), so
    # the kernel never runs a lane-sparse N=3 / K=3 matmul.
    xm = jnp.einsum("jk,bck->bjc", adjT, x_ncl)         # (B, 24, 3)

    BT = _choose_bt(B)
    n_steps = -(-B // BT)
    B_pad = n_steps * BT
    if B_pad != B:
        xm = jnp.pad(xm, ((0, B_pad - B), (0, 0), (0, 0)))

    w1, b1 = params["w1"], params["b1"]                 # (3, 256), (1, 256) f32
    b2, b3 = params["b2"], params["b3"]                 # (1, 256) f32
    # Weights for the big matmuls go in as bf16 (halves weight DMA / residency;
    # accumulation stays f32 inside the kernel).
    w2 = params["w2"].astype(jnp.bfloat16)              # (256, 256)
    w3 = params["w3"].astype(jnp.bfloat16)              # (256, 256)
    # Joint-mix matrix for 8 batches at once: I_8 (x) adjT, constant.
    kron = jnp.kron(jnp.eye(GROUP, dtype=jnp.float32),
                    adjT).astype(jnp.bfloat16)          # (192, 192)

    const = lambda b: (0, 0)                            # resident across steps

    out = pl.pallas_call(
        _gcn_kernel,
        out_shape=jax.ShapeDtypeStruct((B_pad, NUM_JOINTS, DIM), jnp.float32),
        grid_spec=pl.GridSpec(
            grid=(n_steps,),
            in_specs=[
                pl.BlockSpec((BT, NUM_JOINTS, IN_CH), lambda b: (b, 0, 0)),
                pl.BlockSpec((IN_CH, DIM), const),
                pl.BlockSpec((1, DIM), const),
                pl.BlockSpec((DIM, DIM), const),
                pl.BlockSpec((1, DIM), const),
                pl.BlockSpec((DIM, DIM), const),
                pl.BlockSpec((1, DIM), const),
                pl.BlockSpec((GROUP * NUM_JOINTS, GROUP * NUM_JOINTS), const),
            ],
            out_specs=pl.BlockSpec((BT, NUM_JOINTS, DIM), lambda b: (b, 0, 0)),
        ),
        compiler_params=pltpu.CompilerParams(
            dimension_semantics=("parallel",),
            vmem_limit_bytes=48 * 1024 * 1024),
    )(xm, w1, b1, w2, b2, w3, b3, kron)

    out = out[:B]                                       # drop batch padding
    if channels_last:
        return out                                      # (B, 24, 256), lane-dense
    return jnp.transpose(out, (0, 2, 1))                # (B, 256, 24) like PyTorch


def init_params(key):
    """Deterministic synthetic weights matching Conv1d(in, out, 1) shapes."""
    ks = jax.random.split(key, 6)

    def lin(kw, kb, c_in, c_out):
        bound = 1.0 / np.sqrt(c_in)
        # stored transposed as (c_in, c_out) so the kernel right-multiplies
        w = jax.random.uniform(kw, (c_in, c_out), jnp.float32, -bound, bound)
        b = jax.random.uniform(kb, (1, c_out), jnp.float32, -bound, bound)
        return w, b

    w1, b1 = lin(ks[0], ks[1], IN_CH, DIM)
    w2, b2 = lin(ks[2], ks[3], DIM, DIM)
    w3, b3 = lin(ks[4], ks[5], DIM, DIM)
    adj = jnp.asarray(get_smpl_adj(), dtype=jnp.float32)  # (24, 24)
    return {
        "w1": w1, "b1": b1, "w2": w2, "b2": b2, "w3": w3, "b3": b3,
        "adjT": adj.T,
    }


def gcn_reference(x_ncl, params):
    """Pure-JAX f32 reference reproducing the PyTorch forward exactly."""
    adj = params["adjT"].T  # (24, 24)

    def gconv(h, w, b):
        # h: (B, C_in, 24); Conv1d(k=1): (B, C_out, 24)
        y = jnp.einsum("bcj,cd->bdj", h, w) + b[0][None, :, None]
        z = jnp.matmul(y, adj)  # (B, C_out, 24)
        return jax.nn.relu(z)

    h = gconv(x_ncl, params["w1"], params["b1"])
    h = gconv(h, params["w2"], params["b2"])
    h = gconv(h, params["w3"], params["b3"])
    return h


if __name__ == "__main__":
    key = jax.random.PRNGKey(0)
    k_param, k_x1, k_x2 = jax.random.split(key, 3)
    params = init_params(k_param)

    # Tolerance is relaxed vs. the f32 reference because the kernel runs the
    # MXU with bf16 operands (f32 accumulate); estimated worst-case error is a
    # few 1e-3 at these magnitudes, so 3e-2 leaves ample margin.
    ATOL = RTOL = 3e-2

    # Small batch like the PyTorch module: (B, 3 channels, 24 joints).
    # B=4 -> BT=8 (one grid step, 4 padded rows that are sliced off).
    B1 = 4
    x1 = jax.random.normal(k_x1, (B1, IN_CH, NUM_JOINTS), dtype=jnp.float32)
    out1 = jax.block_until_ready(gcn_forward(x1, params))   # (B, 256, 24)
    ref1 = gcn_reference(x1, params)
    assert out1.shape == (B1, DIM, NUM_JOINTS), out1.shape
    assert jnp.allclose(out1, ref1, atol=ATOL, rtol=RTOL), "mismatch vs reference"

    # Larger batch exercising B-padding and a 2-step grid, on the lane-dense
    # channels_last path (no post-kernel transpose HBM pass).
    B2 = 20
    x2 = jax.random.normal(k_x2, (B2, IN_CH, NUM_JOINTS), dtype=jnp.float32)
    out2 = jax.block_until_ready(gcn_forward(x2, params, channels_last=True))
    ref2 = jnp.transpose(gcn_reference(x2, params), (0, 2, 1))
    assert out2.shape == (B2, NUM_JOINTS, DIM), out2.shape
    assert jnp.allclose(out2, ref2, atol=ATOL, rtol=RTOL), "mismatch vs reference (NLC)"

    print("KERNEL_OK")
</pallas_src>

<mosaic_0001>
module attributes {stable_mosaic.version = 11 : i64} {
  func.func @_gcn_kernel(%arg0: i32, %arg1: memref<8x24x3xf32, #tpu.memory_space<vmem>>, %arg2: memref<3x256xf32, #tpu.memory_space<vmem>>, %arg3: memref<1x256xf32, #tpu.memory_space<vmem>>, %arg4: memref<256x256xbf16, #tpu.memory_space<vmem>>, %arg5: memref<1x256xf32, #tpu.memory_space<vmem>>, %arg6: memref<256x256xbf16, #tpu.memory_space<vmem>>, %arg7: memref<1x256xf32, #tpu.memory_space<vmem>>, %arg8: memref<192x192xbf16, #tpu.memory_space<vmem>>, %arg9: memref<8x24x256xf32, #tpu.memory_space<vmem>>) attributes {dimension_semantics = [#tpu.dimension_semantics<parallel>], iteration_bounds = array<i64: 1>, scalar_prefetch = 0 : i64, scratch_operands = 0 : i64, tpu.core_type = #tpu.core_type<tc>, window_params = [{transform_indices = @transform_0, window_bounds = array<i64: 8, 24, 3>}, {pipeline_mode = #tpu.pipeline_mode<synchronous>, transform_indices = @transform_1, window_bounds = array<i64: 3, 256>}, {pipeline_mode = #tpu.pipeline_mode<synchronous>, transform_indices = @transform_2, window_bounds = array<i64: 1, 256>}, {pipeline_mode = #tpu.pipeline_mode<synchronous>, transform_indices = @transform_3, window_bounds = array<i64: 256, 256>}, {pipeline_mode = #tpu.pipeline_mode<synchronous>, transform_indices = @transform_4, window_bounds = array<i64: 1, 256>}, {pipeline_mode = #tpu.pipeline_mode<synchronous>, transform_indices = @transform_5, window_bounds = array<i64: 256, 256>}, {pipeline_mode = #tpu.pipeline_mode<synchronous>, transform_indices = @transform_6, window_bounds = array<i64: 1, 256>}, {pipeline_mode = #tpu.pipeline_mode<synchronous>, transform_indices = @transform_7, window_bounds = array<i64: 192, 192>}, {transform_indices = @transform_8, window_bounds = array<i64: 8, 24, 256>}]} {
    %c0 = arith.constant 0 : index
    %c0_0 = arith.constant 0 : index
    %c0_1 = arith.constant 0 : index
    %0 = vector.load %arg1[%c0, %c0_0, %c0_1] : memref<8x24x3xf32, #tpu.memory_space<vmem>>, vector<8x24x3xf32>
    %c0_2 = arith.constant 0 : index
    %c0_3 = arith.constant 0 : index
    %1 = vector.load %arg2[%c0_2, %c0_3] : memref<3x256xf32, #tpu.memory_space<vmem>>, vector<3x256xf32>
    %2 = vector.extract_strided_slice %0 {offsets = [0, 0, 0], sizes = [8, 24, 1], strides = [1, 1, 1]} : vector<8x24x3xf32> to vector<8x24x1xf32>
    %3 = vector.extract_strided_slice %1 {offsets = [0, 0], sizes = [1, 256], strides = [1, 1]} : vector<3x256xf32> to vector<1x256xf32>
    %4 = vector.shape_cast %3 : vector<1x256xf32> to vector<1x1x256xf32>
    %5 = vector.broadcast %2 : vector<8x24x1xf32> to vector<8x24x256xf32>
    %6 = vector.broadcast %4 : vector<1x1x256xf32> to vector<8x24x256xf32>
    %7 = arith.mulf %5, %6 : vector<8x24x256xf32>
    %8 = vector.extract_strided_slice %0 {offsets = [0, 0, 1], sizes = [8, 24, 1], strides = [1, 1, 1]} : vector<8x24x3xf32> to vector<8x24x1xf32>
    %9 = vector.extract_strided_slice %1 {offsets = [1, 0], sizes = [1, 256], strides = [1, 1]} : vector<3x256xf32> to vector<1x256xf32>
    %10 = vector.shape_cast %9 : vector<1x256xf32> to vector<1x1x256xf32>
    %11 = vector.broadcast %8 : vector<8x24x1xf32> to vector<8x24x256xf32>
    %12 = vector.broadcast %10 : vector<1x1x256xf32> to vector<8x24x256xf32>
    %13 = arith.mulf %11, %12 : vector<8x24x256xf32>
    %14 = arith.addf %7, %13 : vector<8x24x256xf32>
    %15 = vector.extract_strided_slice %0 {offsets = [0, 0, 2], sizes = [8, 24, 1], strides = [1, 1, 1]} : vector<8x24x3xf32> to vector<8x24x1xf32>
    %16 = vector.extract_strided_slice %1 {offsets = [2, 0], sizes = [1, 256], strides = [1, 1]} : vector<3x256xf32> to vector<1x256xf32>
    %17 = vector.shape_cast %16 : vector<1x256xf32> to vector<1x1x256xf32>
    %18 = vector.broadcast %15 : vector<8x24x1xf32> to vector<8x24x256xf32>
    %19 = vector.broadcast %17 : vector<1x1x256xf32> to vector<8x24x256xf32>
    %20 = arith.mulf %18, %19 : vector<8x24x256xf32>
    %21 = arith.addf %14, %20 : vector<8x24x256xf32>
    %c0_4 = arith.constant 0 : index
    %c0_5 = arith.constant 0 : index
    %22 = vector.load %arg3[%c0_4, %c0_5] : memref<1x256xf32, #tpu.memory_space<vmem>>, vector<1x256xf32>
    %23 = vector.shape_cast %22 : vector<1x256xf32> to vector<1x1x256xf32>
    %24 = vector.broadcast %23 : vector<1x1x256xf32> to vector<8x24x256xf32>
    %25 = arith.addf %21, %24 : vector<8x24x256xf32>
    %cst = arith.constant 0.000000e+00 : f32
    %26 = vector.broadcast %cst : f32 to vector<8x24x256xf32>
    %27 = arith.maximumf %25, %26 : vector<8x24x256xf32>
    %28 = vector.shape_cast %27 : vector<8x24x256xf32> to vector<192x256xf32>
    %c0_6 = arith.constant 0 : index
    %c0_7 = arith.constant 0 : index
    %29 = vector.load %arg8[%c0_6, %c0_7] : memref<192x192xbf16, #tpu.memory_space<vmem>>, vector<192x192xbf16>
    %30 = arith.truncf %28 : vector<192x256xf32> to vector<192x256xbf16>
    %c0_8 = arith.constant 0 : index
    %c0_9 = arith.constant 0 : index
    %31 = vector.load %arg4[%c0_8, %c0_9] : memref<256x256xbf16, #tpu.memory_space<vmem>>, vector<256x256xbf16>
    %cst_10 = arith.constant dense<0.000000e+00> : vector<192x256xf32>
    %32 = tpu.matmul %30, %31, %cst_10 {dimension_numbers = #tpu.dot_dimension_numbers<[1], [0], [0], [1], [0, 0, 1, 1], [], []>} : vector<192x256xbf16>, vector<256x256xbf16>, vector<192x256xf32> -> vector<192x256xf32>
    %c0_11 = arith.constant 0 : index
    %c0_12 = arith.constant 0 : index
    %33 = vector.load %arg5[%c0_11, %c0_12] : memref<1x256xf32, #tpu.memory_space<vmem>>, vector<1x256xf32>
    %34 = vector.broadcast %33 : vector<1x256xf32> to vector<192x256xf32>
    %35 = arith.addf %32, %34 : vector<192x256xf32>
    %36 = arith.truncf %35 : vector<192x256xf32> to vector<192x256xbf16>
    %cst_13 = arith.constant dense<0.000000e+00> : vector<192x256xf32>
    %37 = tpu.matmul %29, %36, %cst_13 {dimension_numbers = #tpu.dot_dimension_numbers<[1], [0], [0], [1], [0, 0, 1, 1], [], []>} : vector<192x192xbf16>, vector<192x256xbf16>, vector<192x256xf32> -> vector<192x256xf32>
    %cst_14 = arith.constant 0.000000e+00 : f32
    %38 = vector.broadcast %cst_14 : f32 to vector<192x256xf32>
    %39 = arith.maximumf %37, %38 : vector<192x256xf32>
    %40 = arith.truncf %39 : vector<192x256xf32> to vector<192x256xbf16>
    %c0_15 = arith.constant 0 : index
    %c0_16 = arith.constant 0 : index
    %41 = vector.load %arg6[%c0_15, %c0_16] : memref<256x256xbf16, #tpu.memory_space<vmem>>, vector<256x256xbf16>
    %cst_17 = arith.constant dense<0.000000e+00> : vector<192x256xf32>
    %42 = tpu.matmul %40, %41, %cst_17 {dimension_numbers = #tpu.dot_dimension_numbers<[1], [0], [0], [1], [0, 0, 1, 1], [], []>} : vector<192x256xbf16>, vector<256x256xbf16>, vector<192x256xf32> -> vector<192x256xf32>
    %c0_18 = arith.constant 0 : index
    %c0_19 = arith.constant 0 : index
    %43 = vector.load %arg7[%c0_18, %c0_19] : memref<1x256xf32, #tpu.memory_space<vmem>>, vector<1x256xf32>
    %44 = vector.broadcast %43 : vector<1x256xf32> to vector<192x256xf32>
    %45 = arith.addf %42, %44 : vector<192x256xf32>
    %46 = arith.truncf %45 : vector<192x256xf32> to vector<192x256xbf16>
    %cst_20 = arith.constant dense<0.000000e+00> : vector<192x256xf32>
    %47 = tpu.matmul %29, %46, %cst_20 {dimension_numbers = #tpu.dot_dimension_numbers<[1], [0], [0], [1], [0, 0, 1, 1], [], []>} : vector<192x192xbf16>, vector<192x256xbf16>, vector<192x256xf32> -> vector<192x256xf32>
    %cst_21 = arith.constant 0.000000e+00 : f32
    %48 = vector.broadcast %cst_21 : f32 to vector<192x256xf32>
    %49 = arith.maximumf %47, %48 : vector<192x256xf32>
    %50 = vector.shape_cast %49 : vector<192x256xf32> to vector<8x24x256xf32>
    %c0_22 = arith.constant 0 : index
    %c0_23 = arith.constant 0 : index
    %c0_24 = arith.constant 0 : index
    %51 = vector.load %arg9[%c0_22, %c0_23, %c0_24] : memref<8x24x256xf32, #tpu.memory_space<vmem>>, vector<8x24x256xf32>
    tpu.vector_store %arg9[%c0_22, %c0_23, %c0_24], %50 {strides = array<i32>} : memref<8x24x256xf32, #tpu.memory_space<vmem>>, vector<8x24x256xf32>,
    return
  }
  func.func @transform_0(%arg0: i32) -> (i32, i32, i32) {
    %c0_i32 = arith.constant 0 : i32
    %c0_i32_0 = arith.constant 0 : i32
    %c0_i32_1 = arith.constant 0 : i32
    return %arg0, %c0_i32, %c0_i32_0 : i32, i32, i32
  }
  func.func @transform_1(%arg0: i32) -> (i32, i32) {
    %c0_i32 = arith.constant 0 : i32
    %c0_i32_0 = arith.constant 0 : i32
    %c0_i32_1 = arith.constant 0 : i32
    return %c0_i32, %c0_i32_0 : i32, i32
  }
  func.func @transform_2(%arg0: i32) -> (i32, i32) {
    %c0_i32 = arith.constant 0 : i32
    %c0_i32_0 = arith.constant 0 : i32
    %c0_i32_1 = arith.constant 0 : i32
    return %c0_i32, %c0_i32_0 : i32, i32
  }
  func.func @transform_3(%arg0: i32) -> (i32, i32) {
    %c0_i32 = arith.constant 0 : i32
    %c0_i32_0 = arith.constant 0 : i32
    %c0_i32_1 = arith.constant 0 : i32
    return %c0_i32, %c0_i32_0 : i32, i32
  }
  func.func @transform_4(%arg0: i32) -> (i32, i32) {
    %c0_i32 = arith.constant 0 : i32
    %c0_i32_0 = arith.constant 0 : i32
    %c0_i32_1 = arith.constant 0 : i32
    return %c0_i32, %c0_i32_0 : i32, i32
  }
  func.func @transform_5(%arg0: i32) -> (i32, i32) {
    %c0_i32 = arith.constant 0 : i32
    %c0_i32_0 = arith.constant 0 : i32
    %c0_i32_1 = arith.constant 0 : i32
    return %c0_i32, %c0_i32_0 : i32, i32
  }
  func.func @transform_6(%arg0: i32) -> (i32, i32) {
    %c0_i32 = arith.constant 0 : i32
    %c0_i32_0 = arith.constant 0 : i32
    %c0_i32_1 = arith.constant 0 : i32
    return %c0_i32, %c0_i32_0 : i32, i32
  }
  func.func @transform_7(%arg0: i32) -> (i32, i32) {
    %c0_i32 = arith.constant 0 : i32
    %c0_i32_0 = arith.constant 0 : i32
    %c0_i32_1 = arith.constant 0 : i32
    return %c0_i32, %c0_i32_0 : i32, i32
  }
  func.func @transform_8(%arg0: i32) -> (i32, i32, i32) {
    %c0_i32 = arith.constant 0 : i32
    %c0_i32_0 = arith.constant 0 : i32
    %c0_i32_1 = arith.constant 0 : i32
    return %arg0, %c0_i32, %c0_i32_0 : i32, i32, i32
  }
}

</mosaic_0001>

<llo_original>
// kernel: tpu_custom_call.1
$region0: #{tpu_custom_call.1}
  #allocation0 [shape = 'u32[]', space=smem, size = 0x4, offset = 0x4, fixed_abs, tag = 'smem constant byte address 0x4 - core index']
  #allocation1 [shape = 'u32[144,128]{1,0:T(1,128)}', space=vmem, size = 0x12000, scoped, tag = 'internal scratch']
  %s0 = inlined_call_operand.vmem [shape: f32[8,24,3], index: 0, kind: input, shape index: {}]
  %s1 = inlined_call_operand.vmem [shape: f32[3,256], index: 1, kind: input, shape index: {}]
  %s2 = inlined_call_operand.vmem [shape: f32[1,256], index: 2, kind: input, shape index: {}]
  %s3 = inlined_call_operand.hbm [shape: bf16[256,256], index: 3, kind: input, shape index: {}]
  %s4 = inlined_call_operand.vmem [shape: f32[1,256], index: 4, kind: input, shape index: {}]
  %s5 = inlined_call_operand.hbm [shape: bf16[256,256], index: 5, kind: input, shape index: {}]
  %s6 = inlined_call_operand.vmem [shape: f32[1,256], index: 6, kind: input, shape index: {}]
  %s7 = inlined_call_operand.vmem [shape: bf16[192,192], index: 7, kind: input, shape index: {}]
  %s8 = inlined_call_operand.hbm [shape: f32[8,24,256], index: 8, kind: output, shape index: {}]
  %s9 = sld [smem:[#allocation0]]
  $region50: #{tpu_custom_call.1} parent=0
    _
  %s11 = ssub.s32 1, %s9
  %s12 = scalar_select 0, %s11, %s9
  $region1: #{tpu_custom_call.1} parent=0
    #allocation2 [shape = 'u8[131072]{0}', space=vmem, size = 0x20000, scoped, tag = 'input window, operand 3, single buffered']
    #allocation3 [shape = 's32[1]{0}', space=sflag, size = 0x4, scoped, tag = 'scoped memory for tpu_custom_call.1']
    #allocation4 [shape = 's32[1]{0}', space=sflag, size = 0x4, scoped, tag = 'scoped memory for tpu_custom_call.1']
    #allocation5 [shape = 'u8[131072]{0}', space=vmem, size = 0x20000, scoped, tag = 'input window, operand 5, single buffered']
    #allocation6 [shape = 's32[1]{0}', space=sflag, size = 0x4, scoped, tag = 'scoped memory for tpu_custom_call.1']
    #allocation7 [shape = 'u8[196608]{0}', space=vmem, size = 0x30000, scoped, tag = 'output window, operand 0, single buffered']
    %13 = vsyncpa [#allocation3], 0
    %14 = vsyncpa [#allocation6], 0
    %15 = vsyncpa [#allocation4], 0
    // Predicated region
    $region2: #{tpu_custom_call.1} parent=1 // pred_check
      _
    $region3: #{tpu_custom_call.1} parent=1 // pred_check_branch
      %17 = sbr.rel (0) target = $region5
    $region4: #{tpu_custom_call.1} parent=1 // pred_region
      _
    $region5: #{tpu_custom_call.1} parent=1 // pred_fallthru
      _
    // Predicated region
    $region6: #{tpu_custom_call.1} parent=1 // pred_check
      _
    $region7: #{tpu_custom_call.1} parent=1 // pred_check_branch
      %19 = sbr.rel (0) target = $region9
    $region8: #{tpu_custom_call.1} parent=1 // pred_region
      _
    $region9: #{tpu_custom_call.1} parent=1 // pred_fallthru
      _
    // Predicated region
    $region10: #{tpu_custom_call.1} parent=1 // pred_check
      _
    $region11: #{tpu_custom_call.1} parent=1 // pred_check_branch
      %21 = sbr.rel (0) target = $region13
    $region12: #{tpu_custom_call.1} parent=1 // pred_region
      _
    $region13: #{tpu_custom_call.1} parent=1 // pred_fallthru
      _
    // Predicated region
    $region14: #{tpu_custom_call.1} parent=1 // pred_check
      _
    $region15: #{tpu_custom_call.1} parent=1 // pred_check_branch
      %23 = sbr.rel (0) target = $region17
    $region16: #{tpu_custom_call.1} parent=1 // pred_region
      %s25 = ssub.s32 4096, 4096
      %26 = vsyncadd [#allocation3], %s25
      %s27 = sshll.u32 [#allocation2], 4
      %s28 = int_to_ptr.vmem [resolvable:$true] %s27
      %33 = dma.hbm_to_vmem [thread:$0]  %s3, 4096, %s28, [#allocation3], 128, 128, 8
    $region17: #{tpu_custom_call.1} parent=1 // pred_fallthru
      _
    // Predicated region
    $region18: #{tpu_custom_call.1} parent=1 // pred_check
      _
    $region19: #{tpu_custom_call.1} parent=1 // pred_check_branch
      %35 = sbr.rel (0) target = $region21
    $region20: #{tpu_custom_call.1} parent=1 // pred_region
      _
    $region21: #{tpu_custom_call.1} parent=1 // pred_fallthru
      _
    // Predicated region
    $region22: #{tpu_custom_call.1} parent=1 // pred_check
      _
    $region23: #{tpu_custom_call.1} parent=1 // pred_check_branch
      %37 = sbr.rel (0) target = $region25
    $region24: #{tpu_custom_call.1} parent=1 // pred_region
      %s39 = ssub.s32 4096, 4096
      %40 = vsyncadd [#allocation6], %s39
      %s41 = sshll.u32 [#allocation5], 4
      %s42 = int_to_ptr.vmem [resolvable:$true] %s41
      %47 = dma.hbm_to_vmem [thread:$0]  %s5, 4096, %s42, [#allocation6], 128, 128, 8
    $region25: #{tpu_custom_call.1} parent=1 // pred_fallthru
      _
    // Predicated region
    $region26: #{tpu_custom_call.1} parent=1 // pred_check
      _
    $region27: #{tpu_custom_call.1} parent=1 // pred_check_branch
      %49 = sbr.rel (0) target = $region29
    $region28: #{tpu_custom_call.1} parent=1 // pred_region
      _
    $region29: #{tpu_custom_call.1} parent=1 // pred_fallthru
      _
    // Predicated region
    $region30: #{tpu_custom_call.1} parent=1 // pred_check
      _
    $region31: #{tpu_custom_call.1} parent=1 // pred_check_branch
      %51 = sbr.rel (0) target = $region33
    $region32: #{tpu_custom_call.1} parent=1 // pred_region
      _
    $region33: #{tpu_custom_call.1} parent=1 // pred_fallthru
      _
    // Predicated region
    $region34: #{tpu_custom_call.1} parent=1 // pred_check
      _
    $region35: #{tpu_custom_call.1} parent=1 // pred_check_branch
      %53 = sbr.rel (0) target = $region37
    $region36: #{tpu_custom_call.1} parent=1 // pred_region
      %54 = dma.done [#allocation3], 4096
    $region37: #{tpu_custom_call.1} parent=1 // pred_fallthru
      _
    // Predicated region
    $region38: #{tpu_custom_call.1} parent=1 // pred_check
      _
    $region39: #{tpu_custom_call.1} parent=1 // pred_check_branch
      %56 = sbr.rel (0) target = $region41
    $region40: #{tpu_custom_call.1} parent=1 // pred_region
      %57 = dma.done [#allocation6], 4096
    $region41: #{tpu_custom_call.1} parent=1 // pred_fallthru
      _
    %v59 = vld [vmem:[%s0] sm:$0xff]
    %v60 = vld [vmem:[%s0 + $0x8] sm:$0xff]
    %v61 = vld [vmem:[%s0 + $0x10] sm:$0xff]
    %v62 = vld [vmem:[%s0 + $0x18] sm:$0xff]
    %v63 = vld [vmem:[%s0 + $0x20] sm:$0xff]
    %v64 = vld [vmem:[%s0 + $0x28] sm:$0xff]
    %v65 = vld [vmem:[%s0 + $0x30] sm:$0xff]
    %v66 = vld [vmem:[%s0 + $0x38] sm:$0xff]
    %v67 = vld [vmem:[%s0 + $0x40] sm:$0xff]
    %v68 = vld [vmem:[%s0 + $0x48] sm:$0xff]
    %v69 = vld [vmem:[%s0 + $0x50] sm:$0xff]
    %v70 = vld [vmem:[%s0 + $0x58] sm:$0xff]
    %v71 = vld [vmem:[%s0 + $0x60] sm:$0xff]
    %v72 = vld [vmem:[%s0 + $0x68] sm:$0xff]
    %v73 = vld [vmem:[%s0 + $0x70] sm:$0xff]
    %v74 = vld [vmem:[%s0 + $0x78] sm:$0xff]
    %v75 = vld [vmem:[%s0 + $0x80] sm:$0xff]
    %v76 = vld [vmem:[%s0 + $0x88] sm:$0xff]
    %v77 = vld [vmem:[%s0 + $0x90] sm:$0xff]
    %v78 = vld [vmem:[%s0 + $0x98] sm:$0xff]
    %v79 = vld [vmem:[%s0 + $0xa0] sm:$0xff]
    %v80 = vld [vmem:[%s0 + $0xa8] sm:$0xff]
    %v81 = vld [vmem:[%s0 + $0xb0] sm:$0xff]
    %v82 = vld [vmem:[%s0 + $0xb8] sm:$0xff]
    %v83 = vld [vmem:[%s1] sm:$0x77]
    %85 = vset.pattern.permute.xlu0 0
    %86 = vperm.xlu0 %85, %v59
    %v87 = vpop.permute.xlu0 %86
    %90 = vset.pattern.permute.xlu0 0
    %91 = vperm.xlu0 %90, %v60
    %v92 = vpop.permute.xlu0 %91
    %95 = vset.pattern.permute.xlu0 0
    %96 = vperm.xlu0 %95, %v61
    %v97 = vpop.permute.xlu0 %96
    %100 = vset.pattern.permute.xlu0 0
    %101 = vperm.xlu0 %100, %v62
    %v102 = vpop.permute.xlu0 %101
    %105 = vset.pattern.permute.xlu0 0
    %106 = vperm.xlu0 %105, %v63
    %v107 = vpop.permute.xlu0 %106
    %110 = vset.pattern.permute.xlu0 0
    %111 = vperm.xlu0 %110, %v64
    %v112 = vpop.permute.xlu0 %111
    %115 = vset.pattern.permute.xlu0 0
    %116 = vperm.xlu0 %115, %v65
    %v117 = vpop.permute.xlu0 %116
    %120 = vset.pattern.permute.xlu0 0
    %121 = vperm.xlu0 %120, %v66
    %v122 = vpop.permute.xlu0 %121
    %125 = vset.pattern.permute.xlu0 0
    %126 = vperm.xlu0 %125, %v67
    %v127 = vpop.permute.xlu0 %126
    %130 = vset.pattern.permute.xlu0 0
    %131 = vperm.xlu0 %130, %v68
    %v132 = vpop.permute.xlu0 %131
    %135 = vset.pattern.permute.xlu0 0
    %136 = vperm.xlu0 %135, %v69
    %v137 = vpop.permute.xlu0 %136
    %140 = vset.pattern.permute.xlu0 0
    %141 = vperm.xlu0 %140, %v70
    %v142 = vpop.permute.xlu0 %141
    %145 = vset.pattern.permute.xlu0 0
    %146 = vperm.xlu0 %145, %v71
    %v147 = vpop.permute.xlu0 %146
    %150 = vset.pattern.permute.xlu0 0
    %151 = vperm.xlu0 %150, %v72
    %v152 = vpop.permute.xlu0 %151
    %155 = vset.pattern.permute.xlu0 0
    %156 = vperm.xlu0 %155, %v73
    %v157 = vpop.permute.xlu0 %156
    %160 = vset.pattern.permute.xlu0 0
    %161 = vperm.xlu0 %160, %v74
    %v162 = vpop.permute.xlu0 %161
    %165 = vset.pattern.permute.xlu0 0
    %166 = vperm.xlu0 %165, %v75
    %v167 = vpop.permute.xlu0 %166
    %170 = vset.pattern.permute.xlu0 0
    %171 = vperm.xlu0 %170, %v76
    %v172 = vpop.permute.xlu0 %171
    %175 = vset.pattern.permute.xlu0 0
    %176 = vperm.xlu0 %175, %v77
    %v177 = vpop.permute.xlu0 %176
    %180 = vset.pattern.permute.xlu0 0
    %181 = vperm.xlu0 %180, %v78
    %v182 = vpop.permute.xlu0 %181
    %185 = vset.pattern.permute.xlu0 0
    %186 = vperm.xlu0 %185, %v79
    %v187 = vpop.permute.xlu0 %186
    %190 = vset.pattern.permute.xlu0 0
    %191 = vperm.xlu0 %190, %v80
    %v192 = vpop.permute.xlu0 %191
    %195 = vset.pattern.permute.xlu0 0
    %196 = vperm.xlu0 %195, %v81
    %v197 = vpop.permute.xlu0 %196
    %200 = vset.pattern.permute.xlu0 0
    %201 = vperm.xlu0 %200, %v82
    %v202 = vpop.permute.xlu0 %201
    %v205 = vlaneseq
    %v206 = vshrl.u32 %v205, 7
    %v207 = vsub.s32 0, %v206
    %v208 = vrot.slane %v83, %v207
    %v209 = vlaneseq
    %v210 = vshrl.u32 %v209, 7
    %v211 = vsub.s32 4, %v210
    %v212 = vrot.slane %v83, %v211
    %v215 = vlaneseq
    %v216 = vshrl.u32 %v215, 7
    %v217 = vsub.s32 0, %v216
    %v218 = vrot.slane %v208, %v217
    %v219 = vlaneseq
    %v220 = vshrl.u32 %v219, 7
    %v221 = vsub.s32 0, %v220
    %v222 = vrot.slane %v212, %v221
    %v223 = vmul.f32 %v87, %v218
    %v224 = vmul.f32 %v87, %v222
    %v225 = vmul.f32 %v92, %v218
    %v226 = vmul.f32 %v92, %v222
    %v227 = vmul.f32 %v97, %v218
    %v228 = vmul.f32 %v97, %v222
    %v229 = vmul.f32 %v102, %v218
    %v230 = vmul.f32 %v102, %v222
    %v231 = vmul.f32 %v107, %v218
    %v232 = vmul.f32 %v107, %v222
    %v233 = vmul.f32 %v112, %v218
    %v234 = vmul.f32 %v112, %v222
    %v235 = vmul.f32 %v117, %v218
    %v236 = vmul.f32 %v117, %v222
    %v237 = vmul.f32 %v122, %v218
    %v238 = vmul.f32 %v122, %v222
    %v239 = vmul.f32 %v127, %v218
    %v240 = vmul.f32 %v127, %v222
    %v241 = vmul.f32 %v132, %v218
    %v242 = vmul.f32 %v132, %v222
    %v243 = vmul.f32 %v137, %v218
    %v244 = vmul.f32 %v137, %v222
    %v245 = vmul.f32 %v142, %v218
    %v246 = vmul.f32 %v142, %v222
    %v247 = vmul.f32 %v147, %v218
    %v248 = vmul.f32 %v147, %v222
    %v249 = vmul.f32 %v152, %v218
    %v250 = vmul.f32 %v152, %v222
    %v251 = vmul.f32 %v157, %v218
    %v252 = vmul.f32 %v157, %v222
    %v253 = vmul.f32 %v162, %v218
    %v254 = vmul.f32 %v162, %v222
    %v255 = vmul.f32 %v167, %v218
    %v256 = vmul.f32 %v167, %v222
    %v257 = vmul.f32 %v172, %v218
    %v258 = vmul.f32 %v172, %v222
    %v259 = vmul.f32 %v177, %v218
    %v260 = vmul.f32 %v177, %v222
    %v261 = vmul.f32 %v182, %v218
    %v262 = vmul.f32 %v182, %v222
    %v263 = vmul.f32 %v187, %v218
    %v264 = vmul.f32 %v187, %v222
    %v265 = vmul.f32 %v192, %v218
    %v266 = vmul.f32 %v192, %v222
    %v267 = vmul.f32 %v197, %v218
    %v268 = vmul.f32 %v197, %v222
    %v269 = vmul.f32 %v202, %v218
    %v270 = vmul.f32 %v202, %v222
    %271 = vset.pattern.permute.xlu0 1
    %272 = vperm.xlu0 %271, %v59
    %v273 = vpop.permute.xlu0 %272
    %275 = vset.pattern.permute.xlu0 1
    %276 = vperm.xlu0 %275, %v60
    %v277 = vpop.permute.xlu0 %276
    %279 = vset.pattern.permute.xlu0 1
    %280 = vperm.xlu0 %279, %v61
    %v281 = vpop.permute.xlu0 %280
    %283 = vset.pattern.permute.xlu0 1
    %284 = vperm.xlu0 %283, %v62
    %v285 = vpop.permute.xlu0 %284
    %287 = vset.pattern.permute.xlu0 1
    %288 = vperm.xlu0 %287, %v63
    %v289 = vpop.permute.xlu0 %288
    %291 = vset.pattern.permute.xlu0 1
    %292 = vperm.xlu0 %291, %v64
    %v293 = vpop.permute.xlu0 %292
    %295 = vset.pattern.permute.xlu0 1
    %296 = vperm.xlu0 %295, %v65
    %v297 = vpop.permute.xlu0 %296
    %299 = vset.pattern.permute.xlu0 1
    %300 = vperm.xlu0 %299, %v66
    %v301 = vpop.permute.xlu0 %300
    %303 = vset.pattern.permute.xlu0 1
    %304 = vperm.xlu0 %303, %v67
    %v305 = vpop.permute.xlu0 %304
    %307 = vset.pattern.permute.xlu0 1
    %308 = vperm.xlu0 %307, %v68
    %v309 = vpop.permute.xlu0 %308
    %311 = vset.pattern.permute.xlu0 1
    %312 = vperm.xlu0 %311, %v69
    %v313 = vpop.permute.xlu0 %312
    %315 = vset.pattern.permute.xlu0 1
    %316 = vperm.xlu0 %315, %v70
    %v317 = vpop.permute.xlu0 %316
    %319 = vset.pattern.permute.xlu0 1
    %320 = vperm.xlu0 %319, %v71
    %v321 = vpop.permute.xlu0 %320
    %323 = vset.pattern.permute.xlu0 1
    %324 = vperm.xlu0 %323, %v72
    %v325 = vpop.permute.xlu0 %324
    %327 = vset.pattern.permute.xlu0 1
    %328 = vperm.xlu0 %327, %v73
    %v329 = vpop.permute.xlu0 %328
    %331 = vset.pattern.permute.xlu0 1
    %332 = vperm.xlu0 %331, %v74
    %v333 = vpop.permute.xlu0 %332
    %335 = vset.pattern.permute.xlu0 1
    %336 = vperm.xlu0 %335, %v75
    %v337 = vpop.permute.xlu0 %336
    %339 = vset.pattern.permute.xlu0 1
    %340 = vperm.xlu0 %339, %v76
    %v341 = vpop.permute.xlu0 %340
    %343 = vset.pattern.permute.xlu0 1
    %344 = vperm.xlu0 %343, %v77
    %v345 = vpop.permute.xlu0 %344
    %347 = vset.pattern.permute.xlu0 1
    %348 = vperm.xlu0 %347, %v78
    %v349 = vpop.permute.xlu0 %348
    %351 = vset.pattern.permute.xlu0 1
    %352 = vperm.xlu0 %351, %v79
    %v353 = vpop.permute.xlu0 %352
    %355 = vset.pattern.permute.xlu0 1
    %356 = vperm.xlu0 %355, %v80
    %v357 = vpop.permute.xlu0 %356
    %359 = vset.pattern.permute.xlu0 1
    %360 = vperm.xlu0 %359, %v81
    %v361 = vpop.permute.xlu0 %360
    %363 = vset.pattern.permute.xlu0 1
    %364 = vperm.xlu0 %363, %v82
    %v365 = vpop.permute.xlu0 %364
    %v367 = vlaneseq
    %v368 = vshrl.u32 %v367, 7
    %v369 = vsub.s32 1, %v368
    %v370 = vrot.slane %v83, %v369
    %v371 = vlaneseq
    %v372 = vshrl.u32 %v371, 7
    %v373 = vsub.s32 5, %v372
    %v374 = vrot.slane %v83, %v373
    %v377 = vlaneseq
    %v378 = vshrl.u32 %v377, 7
    %v379 = vsub.s32 1, %v378
    %v380 = vrot.slane %v370, %v379
    %v381 = vlaneseq
    %v382 = vshrl.u32 %v381, 7
    %v383 = vsub.s32 1, %v382
    %v384 = vrot.slane %v374, %v383
    %v385 = vmul.f32 %v273, %v380
    %v386 = vmul.f32 %v273, %v384
    %v387 = vmul.f32 %v277, %v380
    %v388 = vmul.f32 %v277, %v384
    %v389 = vmul.f32 %v281, %v380
    %v390 = vmul.f32 %v281, %v384
    %v391 = vmul.f32 %v285, %v380
    %v392 = vmul.f32 %v285, %v384
    %v393 = vmul.f32 %v289, %v380
    %v394 = vmul.f32 %v289, %v384
    %v395 = vmul.f32 %v293, %v380
    %v396 = vmul.f32 %v293, %v384
    %v397 = vmul.f32 %v297, %v380
    %v398 = vmul.f32 %v297, %v384
    %v399 = vmul.f32 %v301, %v380
    %v400 = vmul.f32 %v301, %v384
    %v401 = vmul.f32 %v305, %v380
    %v402 = vmul.f32 %v305, %v384
    %v403 = vmul.f32 %v309, %v380
    %v404 = vmul.f32 %v309, %v384
    %v405 = vmul.f32 %v313, %v380
    %v406 = vmul.f32 %v313, %v384
    %v407 = vmul.f32 %v317, %v380
    %v408 = vmul.f32 %v317, %v384
    %v409 = vmul.f32 %v321, %v380
    %v410 = vmul.f32 %v321, %v384
    %v411 = vmul.f32 %v325, %v380
    %v412 = vmul.f32 %v325, %v384
    %v413 = vmul.f32 %v329, %v380
    %v414 = vmul.f32 %v329, %v384
    %v415 = vmul.f32 %v333, %v380
    %v416 = vmul.f32 %v333, %v384
    %v417 = vmul.f32 %v337, %v380
    %v418 = vmul.f32 %v337, %v384
    %v419 = vmul.f32 %v341, %v380
    %v420 = vmul.f32 %v341, %v384
    %v421 = vmul.f32 %v345, %v380
    %v422 = vmul.f32 %v345, %v384
    %v423 = vmul.f32 %v349, %v380
    %v424 = vmul.f32 %v349, %v384
    %v425 = vmul.f32 %v353, %v380
    %v426 = vmul.f32 %v353, %v384
    %v427 = vmul.f32 %v357, %v380
    %v428 = vmul.f32 %v357, %v384
    %v429 = vmul.f32 %v361, %v380
    %v430 = vmul.f32 %v361, %v384
    %v431 = vmul.f32 %v365, %v380
    %v432 = vmul.f32 %v365, %v384
    %v433 = vadd.f32 %v223, %v385
    %v434 = vadd.f32 %v224, %v386
    %v435 = vadd.f32 %v225, %v387
    %v436 = vadd.f32 %v226, %v388
    %v437 = vadd.f32 %v227, %v389
    %v438 = vadd.f32 %v228, %v390
    %v439 = vadd.f32 %v229, %v391
    %v440 = vadd.f32 %v230, %v392
    %v441 = vadd.f32 %v231, %v393
    %v442 = vadd.f32 %v232, %v394
    %v443 = vadd.f32 %v233, %v395
    %v444 = vadd.f32 %v234, %v396
    %v445 = vadd.f32 %v235, %v397
    %v446 = vadd.f32 %v236, %v398
    %v447 = vadd.f32 %v237, %v399
    %v448 = vadd.f32 %v238, %v400
    %v449 = vadd.f32 %v239, %v401
    %v450 = vadd.f32 %v240, %v402
    %v451 = vadd.f32 %v241, %v403
    %v452 = vadd.f32 %v242, %v404
    %v453 = vadd.f32 %v243, %v405
    %v454 = vadd.f32 %v244, %v406
    %v455 = vadd.f32 %v245, %v407
    %v456 = vadd.f32 %v246, %v408
    %v457 = vadd.f32 %v247, %v409
    %v458 = vadd.f32 %v248, %v410
    %v459 = vadd.f32 %v249, %v411
    %v460 = vadd.f32 %v250, %v412
    %v461 = vadd.f32 %v251, %v413
    %v462 = vadd.f32 %v252, %v414
    %v463 = vadd.f32 %v253, %v415
    %v464 = vadd.f32 %v254, %v416
    %v465 = vadd.f32 %v255, %v417
    %v466 = vadd.f32 %v256, %v418
    %v467 = vadd.f32 %v257, %v419
    %v468 = vadd.f32 %v258, %v420
    %v469 = vadd.f32 %v259, %v421
    %v470 = vadd.f32 %v260, %v422
    %v471 = vadd.f32 %v261, %v423
    %v472 = vadd.f32 %v262, %v424
    %v473 = vadd.f32 %v263, %v425
    %v474 = vadd.f32 %v264, %v426
    %v475 = vadd.f32 %v265, %v427
    %v476 = vadd.f32 %v266, %v428
    %v477 = vadd.f32 %v267, %v429
    %v478 = vadd.f32 %v268, %v430
    %v479 = vadd.f32 %v269, %v431
    %v480 = vadd.f32 %v270, %v432
    %481 = vset.pattern.permute.xlu0 2
    %482 = vperm.xlu0 %481, %v59
    %v483 = vpop.permute.xlu0 %482
    %485 = vset.pattern.permute.xlu0 2
    %486 = vperm.xlu0 %485, %v60
    %v487 = vpop.permute.xlu0 %486
    %489 = vset.pattern.permute.xlu0 2
    %490 = vperm.xlu0 %489, %v61
    %v491 = vpop.permute.xlu0 %490
    %493 = vset.pattern.permute.xlu0 2
    %494 = vperm.xlu0 %493, %v62
    %v495 = vpop.permute.xlu0 %494
    %497 = vset.pattern.permute.xlu0 2
    %498 = vperm.xlu0 %497, %v63
    %v499 = vpop.permute.xlu0 %498
    %501 = vset.pattern.permute.xlu0 2
    %502 = vperm.xlu0 %501, %v64
    %v503 = vpop.permute.xlu0 %502
    %505 = vset.pattern.permute.xlu0 2
    %506 = vperm.xlu0 %505, %v65
    %v507 = vpop.permute.xlu0 %506
    %509 = vset.pattern.permute.xlu0 2
    %510 = vperm.xlu0 %509, %v66
    %v511 = vpop.permute.xlu0 %510
    %513 = vset.pattern.permute.xlu0 2
    %514 = vperm.xlu0 %513, %v67
    %v515 = vpop.permute.xlu0 %514
    %517 = vset.pattern.permute.xlu0 2
    %518 = vperm.xlu0 %517, %v68
    %v519 = vpop.permute.xlu0 %518
    %521 = vset.pattern.permute.xlu0 2
    %522 = vperm.xlu0 %521, %v69
    %v523 = vpop.permute.xlu0 %522
    %525 = vset.pattern.permute.xlu0 2
    %526 = vperm.xlu0 %525, %v70
    %v527 = vpop.permute.xlu0 %526
    %529 = vset.pattern.permute.xlu0 2
    %530 = vperm.xlu0 %529, %v71
    %v531 = vpop.permute.xlu0 %530
    %533 = vset.pattern.permute.xlu0 2
    %534 = vperm.xlu0 %533, %v72
    %v535 = vpop.permute.xlu0 %534
    %537 = vset.pattern.permute.xlu0 2
    %538 = vperm.xlu0 %537, %v73
    %v539 = vpop.permute.xlu0 %538
    %541 = vset.pattern.permute.xlu0 2
    %542 = vperm.xlu0 %541, %v74
    %v543 = vpop.permute.xlu0 %542
    %545 = vset.pattern.permute.xlu0 2
    %546 = vperm.xlu0 %545, %v75
    %v547 = vpop.permute.xlu0 %546
    %549 = vset.pattern.permute.xlu0 2
    %550 = vperm.xlu0 %549, %v76
    %v551 = vpop.permute.xlu0 %550
    %553 = vset.pattern.permute.xlu0 2
    %554 = vperm.xlu0 %553, %v77
    %v555 = vpop.permute.xlu0 %554
    %557 = vset.pattern.permute.xlu0 2
    %558 = vperm.xlu0 %557, %v78
    %v559 = vpop.permute.xlu0 %558
    %561 = vset.pattern.permute.xlu0 2
    %562 = vperm.xlu0 %561, %v79
    %v563 = vpop.permute.xlu0 %562
    %565 = vset.pattern.permute.xlu0 2
    %566 = vperm.xlu0 %565, %v80
    %v567 = vpop.permute.xlu0 %566
    %569 = vset.pattern.permute.xlu0 2
    %570 = vperm.xlu0 %569, %v81
    %v571 = vpop.permute.xlu0 %570
    %573 = vset.pattern.permute.xlu0 2
    %574 = vperm.xlu0 %573, %v82
    %v575 = vpop.permute.xlu0 %574
    %v577 = vlaneseq
    %v578 = vshrl.u32 %v577, 7
    %v579 = vsub.s32 2, %v578
    %v580 = vrot.slane %v83, %v579
    %v581 = vlaneseq
    %v582 = vshrl.u32 %v581, 7
    %v583 = vsub.s32 6, %v582
    %v584 = vrot.slane %v83, %v583
    %v587 = vlaneseq
    %v588 = vshrl.u32 %v587, 7
    %v589 = vsub.s32 2, %v588
    %v590 = vrot.slane %v580, %v589
    %v591 = vlaneseq
    %v592 = vshrl.u32 %v591, 7
    %v593 = vsub.s32 2, %v592
    %v594 = vrot.slane %v584, %v593
    %v595 = vmul.f32 %v483, %v590
    %v596 = vmul.f32 %v483, %v594
    %v597 = vmul.f32 %v487, %v590
    %v598 = vmul.f32 %v487, %v594
    %v599 = vmul.f32 %v491, %v590
    %v600 = vmul.f32 %v491, %v594
    %v601 = vmul.f32 %v495, %v590
    %v602 = vmul.f32 %v495, %v594
    %v603 = vmul.f32 %v499, %v590
    %v604 = vmul.f32 %v499, %v594
    %v605 = vmul.f32 %v503, %v590
    %v606 = vmul.f32 %v503, %v594
    %v607 = vmul.f32 %v507, %v590
    %v608 = vmul.f32 %v507, %v594
    %v609 = vmul.f32 %v511, %v590
    %v610 = vmul.f32 %v511, %v594
    %v611 = vmul.f32 %v515, %v590
    %v612 = vmul.f32 %v515, %v594
    %v613 = vmul.f32 %v519, %v590
    %v614 = vmul.f32 %v519, %v594
    %v615 = vmul.f32 %v523, %v590
    %v616 = vmul.f32 %v523, %v594
    %v617 = vmul.f32 %v527, %v590
    %v618 = vmul.f32 %v527, %v594
    %v619 = vmul.f32 %v531, %v590
    %v620 = vmul.f32 %v531, %v594
    %v621 = vmul.f32 %v535, %v590
    %v622 = vmul.f32 %v535, %v594
    %v623 = vmul.f32 %v539, %v590
    %v624 = vmul.f32 %v539, %v594
    %v625 = vmul.f32 %v543, %v590
    %v626 = vmul.f32 %v543, %v594
    %v627 = vmul.f32 %v547, %v590
    %v628 = vmul.f32 %v547, %v594
    %v629 = vmul.f32 %v551, %v590
    %v630 = vmul.f32 %v551, %v594
    %v631 = vmul.f32 %v555, %v590
    %v632 = vmul.f32 %v555, %v594
    %v633 = vmul.f32 %v559, %v590
    %v634 = vmul.f32 %v559, %v594
    %v635 = vmul.f32 %v563, %v590
    %v636 = vmul.f32 %v563, %v594
    %v637 = vmul.f32 %v567, %v590
    %v638 = vmul.f32 %v567, %v594
    %v639 = vmul.f32 %v571, %v590
    %v640 = vmul.f32 %v571, %v594
    %v641 = vmul.f32 %v575, %v590
    %v642 = vmul.f32 %v575, %v594
    %v643 = vadd.f32 %v433, %v595
    %v644 = vadd.f32 %v434, %v596
    %v645 = vadd.f32 %v435, %v597
    %v646 = vadd.f32 %v436, %v598
    %v647 = vadd.f32 %v437, %v599
    %v648 = vadd.f32 %v438, %v600
    %v649 = vadd.f32 %v439, %v601
    %v650 = vadd.f32 %v440, %v602
    %v651 = vadd.f32 %v441, %v603
    %v652 = vadd.f32 %v442, %v604
    %v653 = vadd.f32 %v443, %v605
    %v654 = vadd.f32 %v444, %v606
    %v655 = vadd.f32 %v445, %v607
    %v656 = vadd.f32 %v446, %v608
    %v657 = vadd.f32 %v447, %v609
    %v658 = vadd.f32 %v448, %v610
    %v659 = vadd.f32 %v449, %v611
    %v660 = vadd.f32 %v450, %v612
    %v661 = vadd.f32 %v451, %v613
    %v662 = vadd.f32 %v452, %v614
    %v663 = vadd.f32 %v453, %v615
    %v664 = vadd.f32 %v454, %v616
    %v665 = vadd.f32 %v455, %v617
    %v666 = vadd.f32 %v456, %v618
    %v667 = vadd.f32 %v457, %v619
    %v668 = vadd.f32 %v458, %v620
    %v669 = vadd.f32 %v459, %v621
    %v670 = vadd.f32 %v460, %v622
    %v671 = vadd.f32 %v461, %v623
    %v672 = vadd.f32 %v462, %v624
    %v673 = vadd.f32 %v463, %v625
    %v674 = vadd.f32 %v464, %v626
    %v675 = vadd.f32 %v465, %v627
    %v676 = vadd.f32 %v466, %v628
    %v677 = vadd.f32 %v467, %v629
    %v678 = vadd.f32 %v468, %v630
    %v679 = vadd.f32 %v469, %v631
    %v680 = vadd.f32 %v470, %v632
    %v681 = vadd.f32 %v471, %v633
    %v682 = vadd.f32 %v472, %v634
    %v683 = vadd.f32 %v473, %v635
    %v684 = vadd.f32 %v474, %v636
    %v685 = vadd.f32 %v475, %v637
    %v686 = vadd.f32 %v476, %v638
    %v687 = vadd.f32 %v477, %v639
    %v688 = vadd.f32 %v478, %v640
    %v689 = vadd.f32 %v479, %v641
    %v690 = vadd.f32 %v480, %v642
    %v691 = vld [vmem:[%s2] sm:$0x3]
    %v693 = vlaneseq
    %v694 = vshrl.u32 %v693, 7
    %v695 = vsub.s32 0, %v694
    %v696 = vrot.slane %v691, %v695
    %v697 = vlaneseq
    %v698 = vshrl.u32 %v697, 7
    %v699 = vsub.s32 1, %v698
    %v700 = vrot.slane %v691, %v699
    %v703 = vadd.f32 %v643, %v696
    %v704 = vadd.f32 %v644, %v700
    %v705 = vadd.f32 %v645, %v696
    %v706 = vadd.f32 %v646, %v700
    %v707 = vadd.f32 %v647, %v696
    %v708 = vadd.f32 %v648, %v700
    %v709 = vadd.f32 %v649, %v696
    %v710 = vadd.f32 %v650, %v700
    %v711 = vadd.f32 %v651, %v696
    %v712 = vadd.f32 %v652, %v700
    %v713 = vadd.f32 %v653, %v696
    %v714 = vadd.f32 %v654, %v700
    %v715 = vadd.f32 %v655, %v696
    %v716 = vadd.f32 %v656, %v700
    %v717 = vadd.f32 %v657, %v696
    %v718 = vadd.f32 %v658, %v700
    %v719 = vadd.f32 %v659, %v696
    %v720 = vadd.f32 %v660, %v700
    %v721 = vadd.f32 %v661, %v696
    %v722 = vadd.f32 %v662, %v700
    %v723 = vadd.f32 %v663, %v696
    %v724 = vadd.f32 %v664, %v700
    %v725 = vadd.f32 %v665, %v696
    %v726 = vadd.f32 %v666, %v700
    %v727 = vadd.f32 %v667, %v696
    %v728 = vadd.f32 %v668, %v700
    %v729 = vadd.f32 %v669, %v696
    %v730 = vadd.f32 %v670, %v700
    %v731 = vadd.f32 %v671, %v696
    %v732 = vadd.f32 %v672, %v700
    %v733 = vadd.f32 %v673, %v696
    %v734 = vadd.f32 %v674, %v700
    %v735 = vadd.f32 %v675, %v696
    %v736 = vadd.f32 %v676, %v700
    %v737 = vadd.f32 %v677, %v696
    %v738 = vadd.f32 %v678, %v700
    %v739 = vadd.f32 %v679, %v696
    %v740 = vadd.f32 %v680, %v700
    %v741 = vadd.f32 %v681, %v696
    %v742 = vadd.f32 %v682, %v700
    %v743 = vadd.f32 %v683, %v696
    %v744 = vadd.f32 %v684, %v700
    %v745 = vadd.f32 %v685, %v696
    %v746 = vadd.f32 %v686, %v700
    %v747 = vadd.f32 %v687, %v696
    %v748 = vadd.f32 %v688, %v700
    %v749 = vadd.f32 %v689, %v696
    %v750 = vadd.f32 %v690, %v700
    %v751 = vmax.f32 %v703, 0.0
    %v752 = vmax.f32 %v704, 0.0
    %v753 = vmax.f32 %v705, 0.0
    %v754 = vmax.f32 %v706, 0.0
    %v755 = vmax.f32 %v707, 0.0
    %v756 = vmax.f32 %v708, 0.0
    %v757 = vmax.f32 %v709, 0.0
    %v758 = vmax.f32 %v710, 0.0
    %v759 = vmax.f32 %v711, 0.0
    %v760 = vmax.f32 %v712, 0.0
    %v761 = vmax.f32 %v713, 0.0
    %v762 = vmax.f32 %v714, 0.0
    %v763 = vmax.f32 %v715, 0.0
    %v764 = vmax.f32 %v716, 0.0
    %v765 = vmax.f32 %v717, 0.0
    %v766 = vmax.f32 %v718, 0.0
    %v767 = vmax.f32 %v719, 0.0
    %v768 = vmax.f32 %v720, 0.0
    %v769 = vmax.f32 %v721, 0.0
    %v770 = vmax.f32 %v722, 0.0
    %v771 = vmax.f32 %v723, 0.0
    %v772 = vmax.f32 %v724, 0.0
    %v773 = vmax.f32 %v725, 0.0
    %v774 = vmax.f32 %v726, 0.0
    %v775 = vmax.f32 %v727, 0.0
    %v776 = vmax.f32 %v728, 0.0
    %v777 = vmax.f32 %v729, 0.0
    %v778 = vmax.f32 %v730, 0.0
    %v779 = vmax.f32 %v731, 0.0
    %v780 = vmax.f32 %v732, 0.0
    %v781 = vmax.f32 %v733, 0.0
    %v782 = vmax.f32 %v734, 0.0
    %v783 = vmax.f32 %v735, 0.0
    %v784 = vmax.f32 %v736, 0.0
    %v785 = vmax.f32 %v737, 0.0
    %v786 = vmax.f32 %v738, 0.0
    %v787 = vmax.f32 %v739, 0.0
    %v788 = vmax.f32 %v740, 0.0
    %v789 = vmax.f32 %v741, 0.0
    %v790 = vmax.f32 %v742, 0.0
    %v791 = vmax.f32 %v743, 0.0
    %v792 = vmax.f32 %v744, 0.0
    %v793 = vmax.f32 %v745, 0.0
    %v794 = vmax.f32 %v746, 0.0
    %v795 = vmax.f32 %v747, 0.0
    %v796 = vmax.f32 %v748, 0.0
    %v797 = vmax.f32 %v749, 0.0
    %v798 = vmax.f32 %v750, 0.0
    %v799 = vld [vmem:[%s7] sm:$0xff]
    %v800 = vld [vmem:[%s7 + $0x8] sm:$0xff]
    %v801 = vld [vmem:[%s7 + $0x10] sm:$0xff]
    %v802 = vld [vmem:[%s7 + $0x18] sm:$0xff]
    %v803 = vld [vmem:[%s7 + $0x20] sm:$0xff]
    %v804 = vld [vmem:[%s7 + $0x28] sm:$0xff]
    %v805 = vld [vmem:[%s7 + $0x30] sm:$0xff]
    %v806 = vld [vmem:[%s7 + $0x38] sm:$0xff]
    %v807 = vld [vmem:[%s7 + $0x40] sm:$0xff]
    %v808 = vld [vmem:[%s7 + $0x48] sm:$0xff]
    %v809 = vld [vmem:[%s7 + $0x50] sm:$0xff]
    %v810 = vld [vmem:[%s7 + $0x58] sm:$0xff]
    %v811 = vld [vmem:[%s7 + $0x60] sm:$0xff]
    %v812 = vld [vmem:[%s7 + $0x68] sm:$0xff]
    %v813 = vld [vmem:[%s7 + $0x70] sm:$0xff]
    %v814 = vld [vmem:[%s7 + $0x78] sm:$0xff]
    %v815 = vld [vmem:[%s7 + $0x80] sm:$0xff]
    %v816 = vld [vmem:[%s7 + $0x88] sm:$0xff]
    %v817 = vld [vmem:[%s7 + $0x90] sm:$0xff]
    %v818 = vld [vmem:[%s7 + $0x98] sm:$0xff]
    %v819 = vld [vmem:[%s7 + $0xa0] sm:$0xff]
    %v820 = vld [vmem:[%s7 + $0xa8] sm:$0xff]
    %v821 = vld [vmem:[%s7 + $0xb0] sm:$0xff]
    %v822 = vld [vmem:[%s7 + $0xb8] sm:$0xff]
    %v823 = vpack.c.bf16 %v753, %v751
    %v824 = vpack.c.bf16 %v754, %v752
    %v825 = vpack.c.bf16 %v757, %v755
    %v826 = vpack.c.bf16 %v758, %v756
    %v827 = vpack.c.bf16 %v761, %v759
    %v828 = vpack.c.bf16 %v762, %v760
    %v829 = vpack.c.bf16 %v765, %v763
    %v830 = vpack.c.bf16 %v766, %v764
    %v831 = vpack.c.bf16 %v769, %v767
    %v832 = vpack.c.bf16 %v770, %v768
    %v833 = vpack.c.bf16 %v773, %v771
    %v834 = vpack.c.bf16 %v774, %v772
    %v835 = vpack.c.bf16 %v777, %v775
    %v836 = vpack.c.bf16 %v778, %v776
    %v837 = vpack.c.bf16 %v781, %v779
    %v838 = vpack.c.bf16 %v782, %v780
    %v839 = vpack.c.bf16 %v785, %v783
    %v840 = vpack.c.bf16 %v786, %v784
    %v841 = vpack.c.bf16 %v789, %v787
    %v842 = vpack.c.bf16 %v790, %v788
    %v843 = vpack.c.bf16 %v793, %v791
    %v844 = vpack.c.bf16 %v794, %v792
    %v845 = vpack.c.bf16 %v797, %v795
    %v846 = vpack.c.bf16 %v798, %v796
    %v847 = vld [vmem:[#allocation2] sm:$0xff]
    %v848 = vld [vmem:[#allocation2 + $0x8] sm:$0xff]
    %v849 = vld [vmem:[#allocation2 + $0x10] sm:$0xff]
    %v850 = vld [vmem:[#allocation2 + $0x18] sm:$0xff]
    %v851 = vld [vmem:[#allocation2 + $0x20] sm:$0xff]
    %v852 = vld [vmem:[#allocation2 + $0x28] sm:$0xff]
    %v853 = vld [vmem:[#allocation2 + $0x30] sm:$0xff]
    %v854 = vld [vmem:[#allocation2 + $0x38] sm:$0xff]
    %v855 = vld [vmem:[#allocation2 + $0x40] sm:$0xff]
    %v856 = vld [vmem:[#allocation2 + $0x48] sm:$0xff]
    %v857 = vld [vmem:[#allocation2 + $0x50] sm:$0xff]
    %v858 = vld [vmem:[#allocation2 + $0x58] sm:$0xff]
    %v859 = vld [vmem:[#allocation2 + $0x60] sm:$0xff]
    %v860 = vld [vmem:[#allocation2 + $0x68] sm:$0xff]
    %v861 = vld [vmem:[#allocation2 + $0x70] sm:$0xff]
    %v862 = vld [vmem:[#allocation2 + $0x78] sm:$0xff]
    %v863 = vld [vmem:[#allocation2 + $0x80] sm:$0xff]
    %v864 = vld [vmem:[#allocation2 + $0x88] sm:$0xff]
    %v865 = vld [vmem:[#allocation2 + $0x90] sm:$0xff]
    %v866 = vld [vmem:[#allocation2 + $0x98] sm:$0xff]
    %v867 = vld [vmem:[#allocation2 + $0xa0] sm:$0xff]
    %v868 = vld [vmem:[#allocation2 + $0xa8] sm:$0xff]
    %v869 = vld [vmem:[#allocation2 + $0xb0] sm:$0xff]
    %v870 = vld [vmem:[#allocation2 + $0xb8] sm:$0xff]
    %v871 = vld [vmem:[#allocation2 + $0xc0] sm:$0xff]
    %v872 = vld [vmem:[#allocation2 + $0xc8] sm:$0xff]
    %v873 = vld [vmem:[#allocation2 + $0xd0] sm:$0xff]
    %v874 = vld [vmem:[#allocation2 + $0xd8] sm:$0xff]
    %v875 = vld [vmem:[#allocation2 + $0xe0] sm:$0xff]
    %v876 = vld [vmem:[#allocation2 + $0xe8] sm:$0xff]
    %v877 = vld [vmem:[#allocation2 + $0xf0] sm:$0xff]
    %v878 = vld [vmem:[#allocation2 + $0xf8] sm:$0xff]
    %v879 = vld [vmem:[%s4] sm:$0x3]
    %v881 = vlaneseq
    %v882 = vshrl.u32 %v881, 7
    %v883 = vsub.s32 0, %v882
    %v884 = vrot.slane %v879, %v883
    %v885 = vlaneseq
    %v886 = vshrl.u32 %v885, 7
    %v887 = vsub.s32 1, %v886
    %v888 = vrot.slane %v879, %v887
    %v923 = vunpack.c.l.b16 %v847
    %v924 = vunpack.c.h.b16 %v847
    %v925 = vunpack.c.l.b16 %v848
    %v926 = vunpack.c.h.b16 %v848
    %v927 = vunpack.c.l.b16 %v849
    %v928 = vunpack.c.h.b16 %v849
    %v929 = vunpack.c.l.b16 %v850
    %v930 = vunpack.c.h.b16 %v850
    %v931 = vunpack.c.l.b16 %v851
    %v932 = vunpack.c.h.b16 %v851
    %v933 = vunpack.c.l.b16 %v852
    %v934 = vunpack.c.h.b16 %v852
    %v935 = vunpack.c.l.b16 %v853
    %v936 = vunpack.c.h.b16 %v853
    %v937 = vunpack.c.l.b16 %v854
    %v938 = vunpack.c.h.b16 %v854
    %v939 = vunpack.c.l.b16 %v855
    %v940 = vunpack.c.h.b16 %v855
    %v941 = vunpack.c.l.b16 %v856
    %v942 = vunpack.c.h.b16 %v856
    %v943 = vunpack.c.l.b16 %v857
    %v944 = vunpack.c.h.b16 %v857
    %v945 = vunpack.c.l.b16 %v858
    %v946 = vunpack.c.h.b16 %v858
    %v947 = vunpack.c.l.b16 %v859
    %v948 = vunpack.c.h.b16 %v859
    %v949 = vunpack.c.l.b16 %v860
    %v950 = vunpack.c.h.b16 %v860
    %v951 = vunpack.c.l.b16 %v861
    %v952 = vunpack.c.h.b16 %v861
    %v953 = vunpack.c.l.b16 %v862
    %v954 = vunpack.c.h.b16 %v862
    %v955 = vunpack.c.l.b16 %v863
    %v956 = vunpack.c.h.b16 %v863
    %v957 = vunpack.c.l.b16 %v864
    %v958 = vunpack.c.h.b16 %v864
    %v959 = vunpack.c.l.b16 %v865
    %v960 = vunpack.c.h.b16 %v865
    %v961 = vunpack.c.l.b16 %v866
    %v962 = vunpack.c.h.b16 %v866
    %v963 = vunpack.c.l.b16 %v867
    %v964 = vunpack.c.h.b16 %v867
    %v965 = vunpack.c.l.b16 %v868
    %v966 = vunpack.c.h.b16 %v868
    %v967 = vunpack.c.l.b16 %v869
    %v968 = vunpack.c.h.b16 %v869
    %v969 = vunpack.c.l.b16 %v870
    %v970 = vunpack.c.h.b16 %v870
    %v971 = vunpack.c.l.b16 %v871
    %v972 = vunpack.c.h.b16 %v871
    %v973 = vunpack.c.l.b16 %v872
    %v974 = vunpack.c.h.b16 %v872
    %v975 = vunpack.c.l.b16 %v873
    %v976 = vunpack.c.h.b16 %v873
    %v977 = vunpack.c.l.b16 %v874
    %v978 = vunpack.c.h.b16 %v874
    %v979 = vunpack.c.l.b16 %v875
    %v980 = vunpack.c.h.b16 %v875
    %v981 = vunpack.c.l.b16 %v876
    %v982 = vunpack.c.h.b16 %v876
    %v983 = vunpack.c.l.b16 %v877
    %v984 = vunpack.c.h.b16 %v877
    %v985 = vunpack.c.l.b16 %v878
    %v986 = vunpack.c.h.b16 %v878
    %v987 = vpack.c.b16 %v925, %v923
    %v988 = vpack.c.b16 %v926, %v924
    %v989 = vpack.c.b16 %v929, %v927
    %v990 = vpack.c.b16 %v930, %v928
    %v991 = vpack.c.b16 %v933, %v931
    %v992 = vpack.c.b16 %v934, %v932
    %v993 = vpack.c.b16 %v937, %v935
    %v994 = vpack.c.b16 %v938, %v936
    %v995 = vpack.c.b16 %v941, %v939
    %v996 = vpack.c.b16 %v942, %v940
    %v997 = vpack.c.b16 %v945, %v943
    %v998 = vpack.c.b16 %v946, %v944
    %v999 = vpack.c.b16 %v949, %v947
    %v1000 = vpack.c.b16 %v950, %v948
    %v1001 = vpack.c.b16 %v953, %v951
    %v1002 = vpack.c.b16 %v954, %v952
    %v1003 = vpack.c.b16 %v957, %v955
    %v1004 = vpack.c.b16 %v958, %v956
    %v1005 = vpack.c.b16 %v961, %v959
    %v1006 = vpack.c.b16 %v962, %v960
    %v1007 = vpack.c.b16 %v965, %v963
    %v1008 = vpack.c.b16 %v966, %v964
    %v1009 = vpack.c.b16 %v969, %v967
    %v1010 = vpack.c.b16 %v970, %v968
    %v1011 = vpack.c.b16 %v973, %v971
    %v1012 = vpack.c.b16 %v974, %v972
    %v1013 = vpack.c.b16 %v977, %v975
    %v1014 = vpack.c.b16 %v978, %v976
    %v1015 = vpack.c.b16 %v981, %v979
    %v1016 = vpack.c.b16 %v982, %v980
    %v1017 = vpack.c.b16 %v985, %v983
    %v1018 = vpack.c.b16 %v986, %v984
    %1051 = vmatprep.subr.bf16.mxu0 %v988
    %1052 = vmatpush1.bf16.msra.mxu0 %v987
    %1053 = vmatprep.subr.bf16.mxu0 %v990
    %1054 = vmatpush1.bf16.msra.mxu0 %v989
    %1055 = vmatprep.subr.bf16.mxu0 %v992
    %1056 = vmatpush1.bf16.msra.mxu0 %v991
    %1057 = vmatprep.subr.bf16.mxu0 %v994
    %1058 = vmatpush1.bf16.msra.mxu0 %v993
    %1059 = vmatprep.subr.bf16.mxu0 %v996
    %1060 = vmatpush1.bf16.msra.mxu0 %v995
    %1061 = vmatprep.subr.bf16.mxu0 %v998
    %1062 = vmatpush1.bf16.msra.mxu0 %v997
    %1063 = vmatprep.subr.bf16.mxu0 %v1000
    %1064 = vmatpush1.bf16.msra.mxu0 %v999
    %1065 = vmatprep.subr.bf16.mxu0 %v1002
    %1066 = vmatpush1.bf16.msra.mxu0 %v1001
    %1067 = vmatprep.subr.bf16.mxu0 %v1004
    %1068 = vmatpush1.bf16.msra.mxu0 %v1003
    %1069 = vmatprep.subr.bf16.mxu0 %v1006
    %1070 = vmatpush1.bf16.msra.mxu0 %v1005
    %1071 = vmatprep.subr.bf16.mxu0 %v1008
    %1072 = vmatpush1.bf16.msra.mxu0 %v1007
    %1073 = vmatprep.subr.bf16.mxu0 %v1010
    %1074 = vmatpush1.bf16.msra.mxu0 %v1009
    %1075 = vmatprep.subr.bf16.mxu0 %v1012
    %1076 = vmatpush1.bf16.msra.mxu0 %v1011
    %1077 = vmatprep.subr.bf16.mxu0 %v1014
    %1078 = vmatpush1.bf16.msra.mxu0 %v1013
    %1079 = vmatprep.subr.bf16.mxu0 %v1016
    %1080 = vmatpush1.bf16.msra.mxu0 %v1015
    %1081 = vmatprep.subr.bf16.mxu0 %v1018
    %1082 = vmatpush1.bf16.msra.mxu0 %v1017
    %1083 = vmatprep.mubr.bf16.mxu0 %v824
    %1084 = vmatmul.mubr.bf16.gmra.mrb[0].mxu0 %v823
    %v1085 = vpop.f32.mrb[0].mxu0
    %v1086 = vadd.f32 %v884, %v1085
    %v1087 = vpop.f32.mrb[0].mxu0
    %v1088 = vadd.f32 %v888, %v1087
    %v1089 = vpop.f32.mrb[0].mxu0
    %v1090 = vadd.f32 %v884, %v1089
    %v1091 = vpop.f32.mrb[0].mxu0
    %v1092 = vadd.f32 %v888, %v1091
    %1093 = vmatprep.mubr.bf16.mxu0 %v826
    %1094 = vmatmul.mubr.bf16.gmra.mrb[0].mxu0 %v825
    %v1095 = vpop.f32.mrb[0].mxu0
    %v1096 = vadd.f32 %v884, %v1095
    %v1097 = vpop.f32.mrb[0].mxu0
    %v1098 = vadd.f32 %v888, %v1097
    %v1099 = vpop.f32.mrb[0].mxu0
    %v1100 = vadd.f32 %v884, %v1099
    %v1101 = vpop.f32.mrb[0].mxu0
    %v1102 = vadd.f32 %v888, %v1101
    %1103 = vmatprep.mubr.bf16.mxu0 %v828
    %1104 = vmatmul.mubr.bf16.gmra.mrb[0].mxu0 %v827
    %v1105 = vpop.f32.mrb[0].mxu0
    %v1106 = vadd.f32 %v884, %v1105
    %v1107 = vpop.f32.mrb[0].mxu0
    %v1108 = vadd.f32 %v888, %v1107
    %v1109 = vpop.f32.mrb[0].mxu0
    %v1110 = vadd.f32 %v884, %v1109
    %v1111 = vpop.f32.mrb[0].mxu0
    %v1112 = vadd.f32 %v888, %v1111
    %1113 = vmatprep.mubr.bf16.mxu0 %v830
    %1114 = vmatmul.mubr.bf16.gmra.mrb[0].mxu0 %v829
    %v1115 = vpop.f32.mrb[0].mxu0
    %v1116 = vadd.f32 %v884, %v1115
    %v1117 = vpop.f32.mrb[0].mxu0
    %v1118 = vadd.f32 %v888, %v1117
    %v1119 = vpop.f32.mrb[0].mxu0
    %v1120 = vadd.f32 %v884, %v1119
    %v1121 = vpop.f32.mrb[0].mxu0
    %v1122 = vadd.f32 %v888, %v1121
    %1123 = vmatprep.mubr.bf16.mxu0 %v832
    %1124 = vmatmul.mubr.bf16.gmra.mrb[0].mxu0 %v831
    %v1125 = vpop.f32.mrb[0].mxu0
    %v1126 = vadd.f32 %v884, %v1125
    %v1127 = vpop.f32.mrb[0].mxu0
    %v1128 = vadd.f32 %v888, %v1127
    %v1129 = vpop.f32.mrb[0].mxu0
    %v1130 = vadd.f32 %v884, %v1129
    %v1131 = vpop.f32.mrb[0].mxu0
    %v1132 = vadd.f32 %v888, %v1131
    %1133 = vmatprep.mubr.bf16.mxu0 %v834
    %1134 = vmatmul.mubr.bf16.gmra.mrb[0].mxu0 %v833
    %v1135 = vpop.f32.mrb[0].mxu0
    %v1136 = vadd.f32 %v884, %v1135
    %v1137 = vpop.f32.mrb[0].mxu0
    %v1138 = vadd.f32 %v888, %v1137
    %v1139 = vpop.f32.mrb[0].mxu0
    %v1140 = vadd.f32 %v884, %v1139
    %v1141 = vpop.f32.mrb[0].mxu0
    %v1142 = vadd.f32 %v888, %v1141
    %1143 = vmatprep.mubr.bf16.mxu0 %v836
    %1144 = vmatmul.mubr.bf16.gmra.mrb[0].mxu0 %v835
    %v1145 = vpop.f32.mrb[0].mxu0
    %v1146 = vadd.f32 %v884, %v1145
    %v1147 = vpop.f32.mrb[0].mxu0
    %v1148 = vadd.f32 %v888, %v1147
    %v1149 = vpop.f32.mrb[0].mxu0
    %v1150 = vadd.f32 %v884, %v1149
    %v1151 = vpop.f32.mrb[0].mxu0
    %v1152 = vadd.f32 %v888, %v1151
    %1153 = vmatprep.mubr.bf16.mxu0 %v838
    %1154 = vmatmul.mubr.bf16.gmra.mrb[0].mxu0 %v837
    %v1155 = vpop.f32.mrb[0].mxu0
    %v1156 = vadd.f32 %v884, %v1155
    %v1157 = vpop.f32.mrb[0].mxu0
    %v1158 = vadd.f32 %v888, %v1157
    %v1159 = vpop.f32.mrb[0].mxu0
    %v1160 = vadd.f32 %v884, %v1159
    %v1161 = vpop.f32.mrb[0].mxu0
    %v1162 = vadd.f32 %v888, %v1161
    %1163 = vmatprep.mubr.bf16.mxu0 %v840
    %1164 = vmatmul.mubr.bf16.gmra.mrb[0].mxu0 %v839
    %v1165 = vpop.f32.mrb[0].mxu0
    %v1166 = vadd.f32 %v884, %v1165
    %v1167 = vpop.f32.mrb[0].mxu0
    %v1168 = vadd.f32 %v888, %v1167
    %v1169 = vpop.f32.mrb[0].mxu0
    %v1170 = vadd.f32 %v884, %v1169
    %v1171 = vpop.f32.mrb[0].mxu0
    %v1172 = vadd.f32 %v888, %v1171
    %1173 = vmatprep.mubr.bf16.mxu0 %v842
    %1174 = vmatmul.mubr.bf16.gmra.mrb[0].mxu0 %v841
    %v1175 = vpop.f32.mrb[0].mxu0
    %v1176 = vadd.f32 %v884, %v1175
    %v1177 = vpop.f32.mrb[0].mxu0
    %v1178 = vadd.f32 %v888, %v1177
    %v1179 = vpop.f32.mrb[0].mxu0
    %v1180 = vadd.f32 %v884, %v1179
    %v1181 = vpop.f32.mrb[0].mxu0
    %v1182 = vadd.f32 %v888, %v1181
    %1183 = vmatprep.mubr.bf16.mxu0 %v844
    %1184 = vmatmul.mubr.bf16.gmra.mrb[0].mxu0 %v843
    %v1185 = vpop.f32.mrb[0].mxu0
    %v1186 = vadd.f32 %v884, %v1185
    %v1187 = vpop.f32.mrb[0].mxu0
    %v1188 = vadd.f32 %v888, %v1187
    %v1189 = vpop.f32.mrb[0].mxu0
    %v1190 = vadd.f32 %v884, %v1189
    %v1191 = vpop.f32.mrb[0].mxu0
    %v1192 = vadd.f32 %v888, %v1191
    %1193 = vmatprep.mubr.bf16.mxu0 %v846
    %1194 = vmatmul.mubr.bf16.gmra.mrb[0].mxu0 %v845
    %v1195 = vpop.f32.mrb[0].mxu0
    %v1196 = vadd.f32 %v884, %v1195
    %v1197 = vpop.f32.mrb[0].mxu0
    %v1198 = vadd.f32 %v888, %v1197
    %v1199 = vpop.f32.mrb[0].mxu0
    %v1200 = vadd.f32 %v884, %v1199
    %v1201 = vpop.f32.mrb[0].mxu0
    %v1202 = vadd.f32 %v888, %v1201
    %1203 = vdwg.mxu0
    %v1204 = vpack.c.bf16 %v1090, %v1086
    %v1205 = vpack.c.bf16 %v1092, %v1088
    %v1206 = vpack.c.bf16 %v1100, %v1096
    %v1207 = vpack.c.bf16 %v1102, %v1098
    %v1208 = vpack.c.bf16 %v1110, %v1106
    %v1209 = vpack.c.bf16 %v1112, %v1108
    %v1210 = vpack.c.bf16 %v1120, %v1116
    %v1211 = vpack.c.bf16 %v1122, %v1118
    %v1212 = vpack.c.bf16 %v1130, %v1126
    %v1213 = vpack.c.bf16 %v1132, %v1128
    %v1214 = vpack.c.bf16 %v1140, %v1136
    %v1215 = vpack.c.bf16 %v1142, %v1138
    %v1216 = vpack.c.bf16 %v1150, %v1146
    %v1217 = vpack.c.bf16 %v1152, %v1148
    %v1218 = vpack.c.bf16 %v1160, %v1156
    %v1219 = vpack.c.bf16 %v1162, %v1158
    %v1220 = vpack.c.bf16 %v1170, %v1166
    %v1221 = vpack.c.bf16 %v1172, %v1168
    %v1222 = vpack.c.bf16 %v1180, %v1176
    %v1223 = vpack.c.bf16 %v1182, %v1178
    %v1224 = vpack.c.bf16 %v1190, %v1186
    %v1225 = vpack.c.bf16 %v1192, %v1188
    %v1226 = vpack.c.bf16 %v1200, %v1196
    %v1227 = vpack.c.bf16 %v1202, %v1198
    %v1252 = vunpack.c.l.b16 %v799
    %v1253 = vunpack.c.h.b16 %v799
    %v1254 = vunpack.c.l.b16 %v800
    %v1255 = vunpack.c.h.b16 %v800
    %v1256 = vunpack.c.l.b16 %v801
    %v1257 = vunpack.c.h.b16 %v801
    %v1258 = vunpack.c.l.b16 %v802
    %v1259 = vunpack.c.h.b16 %v802
    %v1260 = vunpack.c.l.b16 %v803
    %v1261 = vunpack.c.h.b16 %v803
    %v1262 = vunpack.c.l.b16 %v804
    %v1263 = vunpack.c.h.b16 %v804
    %v1264 = vunpack.c.l.b16 %v805
    %v1265 = vunpack.c.h.b16 %v805
    %v1266 = vunpack.c.l.b16 %v806
    %v1267 = vunpack.c.h.b16 %v806
    %v1268 = vunpack.c.l.b16 %v807
    %v1269 = vunpack.c.h.b16 %v807
    %v1270 = vunpack.c.l.b16 %v808
    %v1271 = vunpack.c.h.b16 %v808
    %v1272 = vunpack.c.l.b16 %v809
    %v1273 = vunpack.c.h.b16 %v809
    %v1274 = vunpack.c.l.b16 %v810
    %v1275 = vunpack.c.h.b16 %v810
    %v1276 = vunpack.c.l.b16 %v811
    %v1277 = vunpack.c.h.b16 %v811
    %v1278 = vunpack.c.l.b16 %v812
    %v1279 = vunpack.c.h.b16 %v812
    %v1280 = vunpack.c.l.b16 %v813
    %v1281 = vunpack.c.h.b16 %v813
    %v1282 = vunpack.c.l.b16 %v814
    %v1283 = vunpack.c.h.b16 %v814
    %v1284 = vunpack.c.l.b16 %v815
    %v1285 = vunpack.c.h.b16 %v815
    %v1286 = vunpack.c.l.b16 %v816
    %v1287 = vunpack.c.h.b16 %v816
    %v1288 = vunpack.c.l.b16 %v817
    %v1289 = vunpack.c.h.b16 %v817
    %v1290 = vunpack.c.l.b16 %v818
    %v1291 = vunpack.c.h.b16 %v818
    %v1292 = vunpack.c.l.b16 %v819
    %v1293 = vunpack.c.h.b16 %v819
    %v1294 = vunpack.c.l.b16 %v820
    %v1295 = vunpack.c.h.b16 %v820
    %v1296 = vunpack.c.l.b16 %v821
    %v1297 = vunpack.c.h.b16 %v821
    %v1298 = vunpack.c.l.b16 %v822
    %v1299 = vunpack.c.h.b16 %v822
    %v1300 = vpack.c.b16 %v1254, %v1252
    %v1301 = vpack.c.b16 %v1255, %v1253
    %v1302 = vpack.c.b16 %v1258, %v1256
    %v1303 = vpack.c.b16 %v1259, %v1257
    %v1304 = vpack.c.b16 %v1262, %v1260
    %v1305 = vpack.c.b16 %v1263, %v1261
    %v1306 = vpack.c.b16 %v1266, %v1264
    %v1307 = vpack.c.b16 %v1267, %v1265
    %v1308 = vpack.c.b16 %v1270, %v1268
    %v1309 = vpack.c.b16 %v1271, %v1269
    %v1310 = vpack.c.b16 %v1274, %v1272
    %v1311 = vpack.c.b16 %v1275, %v1273
    %v1312 = vpack.c.b16 %v1278, %v1276
    %v1313 = vpack.c.b16 %v1279, %v1277
    %v1314 = vpack.c.b16 %v1282, %v1280
    %v1315 = vpack.c.b16 %v1283, %v1281
    %v1316 = vpack.c.b16 %v1286, %v1284
    %v1317 = vpack.c.b16 %v1287, %v1285
    %v1318 = vpack.c.b16 %v1290, %v1288
    %v1319 = vpack.c.b16 %v1291, %v1289
    %v1320 = vpack.c.b16 %v1294, %v1292
    %v1321 = vpack.c.b16 %v1295, %v1293
    %v1322 = vpack.c.b16 %v1298, %v1296
    %v1323 = vpack.c.b16 %v1299, %v1297
    %vm1336 = vcmask 523264
    %v1338 = vsel %vm1336, %v1301, 0
    %v1341 = vsel %vm1336, %v1303, 0
    %v1344 = vsel %vm1336, %v1305, 0
    %v1347 = vsel %vm1336, %v1307, 0
    %v1350 = vsel %vm1336, %v1309, 0
    %v1353 = vsel %vm1336, %v1311, 0
    %v1356 = vsel %vm1336, %v1313, 0
    %v1359 = vsel %vm1336, %v1315, 0
    %v1362 = vsel %vm1336, %v1317, 0
    %v1365 = vsel %vm1336, %v1319, 0
    %v1368 = vsel %vm1336, %v1321, 0
    %v1371 = vsel %vm1336, %v1323, 0
    %1373 = vmatprep.subr.bf16.mxu0 %v1205
    %1374 = vmatpush1.bf16.msra.mxu0 %v1204
    %1375 = vmatprep.subr.bf16.mxu0 %v1207
    %1376 = vmatpush1.bf16.msra.mxu0 %v1206
    %1377 = vmatprep.subr.bf16.mxu0 %v1209
    %1378 = vmatpush1.bf16.msra.mxu0 %v1208
    %1379 = vmatprep.subr.bf16.mxu0 %v1211
    %1380 = vmatpush1.bf16.msra.mxu0 %v1210
    %1381 = vmatprep.subr.bf16.mxu0 %v1213
    %1382 = vmatpush1.bf16.msra.mxu0 %v1212
    %1383 = vmatprep.subr.bf16.mxu0 %v1215
    %1384 = vmatpush1.bf16.msra.mxu0 %v1214
    %1385 = vmatprep.subr.bf16.mxu0 %v1217
    %1386 = vmatpush1.bf16.msra.mxu0 %v1216
    %1387 = vmatprep.subr.bf16.mxu0 %v1219
    %1388 = vmatpush1.bf16.msra.mxu0 %v1218
    %1389 = vmatprep.subr.bf16.mxu0 %v1221
    %1390 = vmatpush1.bf16.msra.mxu0 %v1220
    %1391 = vmatprep.subr.bf16.mxu0 %v1223
    %1392 = vmatpush1.bf16.msra.mxu0 %v1222
    %1393 = vmatprep.subr.bf16.mxu0 %v1225
    %1394 = vmatpush1.bf16.msra.mxu0 %v1224
    %1395 = vmatprep.subr.bf16.mxu0 %v1227
    %1396 = vmatpush1.bf16.msra.mxu0 %v1226
    %1397 = vmatprep.subr.bf16.mxu0 0
    %1398 = vmatpush1.bf16.msra.mxu0 0
    %1399 = vmatprep.subr.bf16.mxu0 0
    %1400 = vmatpush1.bf16.msra.mxu0 0
    %1401 = vmatprep.subr.bf16.mxu0 0
    %1402 = vmatpush1.bf16.msra.mxu0 0
    %1403 = vmatprep.subr.bf16.mxu0 0
    %1404 = vmatpush1.bf16.msra.mxu0 0
    %1405 = vmatprep.mubr.bf16.mxu0 %v1338
    %1406 = vmatmul.mubr.bf16.gmra.mrb[0].mxu0 %v1300
    %v1407 = vpop.f32.mrb[0].mxu0
    %v1408 = vadd.f32 0.0, %v1407
    %v1409 = vpop.f32.mrb[0].mxu0
    %v1410 = vadd.f32 0.0, %v1409
    %v1411 = vpop.f32.mrb[0].mxu0
    %v1412 = vadd.f32 0.0, %v1411
    %v1413 = vpop.f32.mrb[0].mxu0
    %v1414 = vadd.f32 0.0, %v1413
    %1415 = vmatprep.mubr.bf16.mxu0 %v1341
    %1416 = vmatmul.mubr.bf16.gmra.mrb[0].mxu0 %v1302
    %v1417 = vpop.f32.mrb[0].mxu0
    %v1418 = vadd.f32 0.0, %v1417
    %v1419 = vpop.f32.mrb[0].mxu0
    %v1420 = vadd.f32 0.0, %v1419
    %v1421 = vpop.f32.mrb[0].mxu0
    %v1422 = vadd.f32 0.0, %v1421
    %v1423 = vpop.f32.mrb[0].mxu0
    %v1424 = vadd.f32 0.0, %v1423
    %1425 = vmatprep.mubr.bf16.mxu0 %v1344
    %1426 = vmatmul.mubr.bf16.gmra.mrb[0].mxu0 %v1304
    %v1427 = vpop.f32.mrb[0].mxu0
    %v1428 = vadd.f32 0.0, %v1427
    %v1429 = vpop.f32.mrb[0].mxu0
    %v1430 = vadd.f32 0.0, %v1429
    %v1431 = vpop.f32.mrb[0].mxu0
    %v1432 = vadd.f32 0.0, %v1431
    %v1433 = vpop.f32.mrb[0].mxu0
    %v1434 = vadd.f32 0.0, %v1433
    %1435 = vmatprep.mubr.bf16.mxu0 %v1347
    %1436 = vmatmul.mubr.bf16.gmra.mrb[0].mxu0 %v1306
    %v1437 = vpop.f32.mrb[0].mxu0
    %v1438 = vadd.f32 0.0, %v1437
    %v1439 = vpop.f32.mrb[0].mxu0
    %v1440 = vadd.f32 0.0, %v1439
    %v1441 = vpop.f32.mrb[0].mxu0
    %v1442 = vadd.f32 0.0, %v1441
    %v1443 = vpop.f32.mrb[0].mxu0
    %v1444 = vadd.f32 0.0, %v1443
    %1445 = vmatprep.mubr.bf16.mxu0 %v1350
    %1446 = vmatmul.mubr.bf16.gmra.mrb[0].mxu0 %v1308
    %v1447 = vpop.f32.mrb[0].mxu0
    %v1448 = vadd.f32 0.0, %v1447
    %v1449 = vpop.f32.mrb[0].mxu0
    %v1450 = vadd.f32 0.0, %v1449
    %v1451 = vpop.f32.mrb[0].mxu0
    %v1452 = vadd.f32 0.0, %v1451
    %v1453 = vpop.f32.mrb[0].mxu0
    %v1454 = vadd.f32 0.0, %v1453
    %1455 = vmatprep.mubr.bf16.mxu0 %v1353
    %1456 = vmatmul.mubr.bf16.gmra.mrb[0].mxu0 %v1310
    %v1457 = vpop.f32.mrb[0].mxu0
    %v1458 = vadd.f32 0.0, %v1457
    %v1459 = vpop.f32.mrb[0].mxu0
    %v1460 = vadd.f32 0.0, %v1459
    %v1461 = vpop.f32.mrb[0].mxu0
    %v1462 = vadd.f32 0.0, %v1461
    %v1463 = vpop.f32.mrb[0].mxu0
    %v1464 = vadd.f32 0.0, %v1463
    %1465 = vmatprep.mubr.bf16.mxu0 %v1356
    %1466 = vmatmul.mubr.bf16.gmra.mrb[0].mxu0 %v1312
    %v1467 = vpop.f32.mrb[0].mxu0
    %v1468 = vadd.f32 0.0, %v1467
    %v1469 = vpop.f32.mrb[0].mxu0
    %v1470 = vadd.f32 0.0, %v1469
    %v1471 = vpop.f32.mrb[0].mxu0
    %v1472 = vadd.f32 0.0, %v1471
    %v1473 = vpop.f32.mrb[0].mxu0
    %v1474 = vadd.f32 0.0, %v1473
    %1475 = vmatprep.mubr.bf16.mxu0 %v1359
    %1476 = vmatmul.mubr.bf16.gmra.mrb[0].mxu0 %v1314
    %v1477 = vpop.f32.mrb[0].mxu0
    %v1478 = vadd.f32 0.0, %v1477
    %v1479 = vpop.f32.mrb[0].mxu0
    %v1480 = vadd.f32 0.0, %v1479
    %v1481 = vpop.f32.mrb[0].mxu0
    %v1482 = vadd.f32 0.0, %v1481
    %v1483 = vpop.f32.mrb[0].mxu0
    %v1484 = vadd.f32 0.0, %v1483
    %1485 = vmatprep.mubr.bf16.mxu0 %v1362
    %1486 = vmatmul.mubr.bf16.gmra.mrb[0].mxu0 %v1316
    %v1487 = vpop.f32.mrb[0].mxu0
    %v1488 = vadd.f32 0.0, %v1487
    %v1489 = vpop.f32.mrb[0].mxu0
    %v1490 = vadd.f32 0.0, %v1489
    %v1491 = vpop.f32.mrb[0].mxu0
    %v1492 = vadd.f32 0.0, %v1491
    %v1493 = vpop.f32.mrb[0].mxu0
    %v1494 = vadd.f32 0.0, %v1493
    %1495 = vmatprep.mubr.bf16.mxu0 %v1365
    %1496 = vmatmul.mubr.bf16.gmra.mrb[0].mxu0 %v1318
    %v1497 = vpop.f32.mrb[0].mxu0
    %v1498 = vadd.f32 0.0, %v1497
    %v1499 = vpop.f32.mrb[0].mxu0
    %v1500 = vadd.f32 0.0, %v1499
    %v1501 = vpop.f32.mrb[0].mxu0
    %v1502 = vadd.f32 0.0, %v1501
    %v1503 = vpop.f32.mrb[0].mxu0
    %v1504 = vadd.f32 0.0, %v1503
    %1505 = vmatprep.mubr.bf16.mxu0 %v1368
    %1506 = vmatmul.mubr.bf16.gmra.mrb[0].mxu0 %v1320
    %v1507 = vpop.f32.mrb[0].mxu0
    %v1508 = vadd.f32 0.0, %v1507
    %v1509 = vpop.f32.mrb[0].mxu0
    %v1510 = vadd.f32 0.0, %v1509
    %v1511 = vpop.f32.mrb[0].mxu0
    %v1512 = vadd.f32 0.0, %v1511
    %v1513 = vpop.f32.mrb[0].mxu0
    %v1514 = vadd.f32 0.0, %v1513
    %1515 = vmatprep.mubr.bf16.mxu0 %v1371
    %1516 = vmatmul.mubr.bf16.gmra.mrb[0].mxu0 %v1322
    %v1517 = vpop.f32.mrb[0].mxu0
    %v1518 = vadd.f32 0.0, %v1517
    %v1519 = vpop.f32.mrb[0].mxu0
    %v1520 = vadd.f32 0.0, %v1519
    %v1521 = vpop.f32.mrb[0].mxu0
    %v1522 = vadd.f32 0.0, %v1521
    %v1523 = vpop.f32.mrb[0].mxu0
    %v1524 = vadd.f32 0.0, %v1523
    %1525 = vdwg.mxu0
    %v1526 = vmax.f32 %v1408, 0.0
    %v1527 = vmax.f32 %v1410, 0.0
    %v1528 = vmax.f32 %v1412, 0.0
    %v1529 = vmax.f32 %v1414, 0.0
    %v1530 = vmax.f32 %v1418, 0.0
    %v1531 = vmax.f32 %v1420, 0.0
    %v1532 = vmax.f32 %v1422, 0.0
    %v1533 = vmax.f32 %v1424, 0.0
    %v1534 = vmax.f32 %v1428, 0.0
    %v1535 = vmax.f32 %v1430, 0.0
    %v1536 = vmax.f32 %v1432, 0.0
    %v1537 = vmax.f32 %v1434, 0.0
    %v1538 = vmax.f32 %v1438, 0.0
    %v1539 = vmax.f32 %v1440, 0.0
    %v1540 = vmax.f32 %v1442, 0.0
    %v1541 = vmax.f32 %v1444, 0.0
    %v1542 = vmax.f32 %v1448, 0.0
    %v1543 = vmax.f32 %v1450, 0.0
    %v1544 = vmax.f32 %v1452, 0.0
    %v1545 = vmax.f32 %v1454, 0.0
    %v1546 = vmax.f32 %v1458, 0.0
    %v1547 = vmax.f32 %v1460, 0.0
    %v1548 = vmax.f32 %v1462, 0.0
    %v1549 = vmax.f32 %v1464, 0.0
    %v1550 = vmax.f32 %v1468, 0.0
    %v1551 = vmax.f32 %v1470, 0.0
    %v1552 = vmax.f32 %v1472, 0.0
    %v1553 = vmax.f32 %v1474, 0.0
    %v1554 = vmax.f32 %v1478, 0.0
    %v1555 = vmax.f32 %v1480, 0.0
    %v1556 = vmax.f32 %v1482, 0.0
    %v1557 = vmax.f32 %v1484, 0.0
    %v1558 = vmax.f32 %v1488, 0.0
    %v1559 = vmax.f32 %v1490, 0.0
    %v1560 = vmax.f32 %v1492, 0.0
    %v1561 = vmax.f32 %v1494, 0.0
    %v1562 = vmax.f32 %v1498, 0.0
    %v1563 = vmax.f32 %v1500, 0.0
    %v1564 = vmax.f32 %v1502, 0.0
    %v1565 = vmax.f32 %v1504, 0.0
    %v1566 = vmax.f32 %v1508, 0.0
    %v1567 = vmax.f32 %v1510, 0.0
    %v1568 = vmax.f32 %v1512, 0.0
    %v1569 = vmax.f32 %v1514, 0.0
    %v1570 = vmax.f32 %v1518, 0.0
    %v1571 = vmax.f32 %v1520, 0.0
    %v1572 = vmax.f32 %v1522, 0.0
    %v1573 = vmax.f32 %v1524, 0.0
    %v1574 = vpack.c.bf16 %v1528, %v1526
    %v1575 = vpack.c.bf16 %v1529, %v1527
    %v1576 = vpack.c.bf16 %v1532, %v1530
    %v1577 = vpack.c.bf16 %v1533, %v1531
    %v1578 = vpack.c.bf16 %v1536, %v1534
    %v1579 = vpack.c.bf16 %v1537, %v1535
    %v1580 = vpack.c.bf16 %v1540, %v1538
    %v1581 = vpack.c.bf16 %v1541, %v1539
    %v1582 = vpack.c.bf16 %v1544, %v1542
    %v1583 = vpack.c.bf16 %v1545, %v1543
    %v1584 = vpack.c.bf16 %v1548, %v1546
    %v1585 = vpack.c.bf16 %v1549, %v1547
    %v1586 = vpack.c.bf16 %v1552, %v1550
    %v1587 = vpack.c.bf16 %v1553, %v1551
    %v1588 = vpack.c.bf16 %v1556, %v1554
    %v1589 = vpack.c.bf16 %v1557, %v1555
    %v1590 = vpack.c.bf16 %v1560, %v1558
    %v1591 = vpack.c.bf16 %v1561, %v1559
    %v1592 = vpack.c.bf16 %v1564, %v1562
    %v1593 = vpack.c.bf16 %v1565, %v1563
    %v1594 = vpack.c.bf16 %v1568, %v1566
    %v1595 = vpack.c.bf16 %v1569, %v1567
    %v1596 = vpack.c.bf16 %v1572, %v1570
    %v1597 = vpack.c.bf16 %v1573, %v1571
    %v1598 = vld [vmem:[#allocation5] sm:$0xff]
    %v1599 = vld [vmem:[#allocation5 + $0x8] sm:$0xff]
    %v1600 = vld [vmem:[#allocation5 + $0x10] sm:$0xff]
    %v1601 = vld [vmem:[#allocation5 + $0x18] sm:$0xff]
    %v1602 = vld [vmem:[#allocation5 + $0x20] sm:$0xff]
    %v1603 = vld [vmem:[#allocation5 + $0x28] sm:$0xff]
    %v1604 = vld [vmem:[#allocation5 + $0x30] sm:$0xff]
    %v1605 = vld [vmem:[#allocation5 + $0x38] sm:$0xff]
    %v1606 = vld [vmem:[#allocation5 + $0x40] sm:$0xff]
    %v1607 = vld [vmem:[#allocation5 + $0x48] sm:$0xff]
    %v1608 = vld [vmem:[#allocation5 + $0x50] sm:$0xff]
    %v1609 = vld [vmem:[#allocation5 + $0x58] sm:$0xff]
    %v1610 = vld [vmem:[#allocation5 + $0x60] sm:$0xff]
    %v1611 = vld [vmem:[#allocation5 + $0x68] sm:$0xff]
    %v1612 = vld [vmem:[#allocation5 + $0x70] sm:$0xff]
    %v1613 = vld [vmem:[#allocation5 + $0x78] sm:$0xff]
    %v1614 = vld [vmem:[#allocation5 + $0x80] sm:$0xff]
    %v1615 = vld [vmem:[#allocation5 + $0x88] sm:$0xff]
    %v1616 = vld [vmem:[#allocation5 + $0x90] sm:$0xff]
    %v1617 = vld [vmem:[#allocation5 + $0x98] sm:$0xff]
    %v1618 = vld [vmem:[#allocation5 + $0xa0] sm:$0xff]
    %v1619 = vld [vmem:[#allocation5 + $0xa8] sm:$0xff]
    %v1620 = vld [vmem:[#allocation5 + $0xb0] sm:$0xff]
    %v1621 = vld [vmem:[#allocation5 + $0xb8] sm:$0xff]
    %v1622 = vld [vmem:[#allocation5 + $0xc0] sm:$0xff]
    %v1623 = vld [vmem:[#allocation5 + $0xc8] sm:$0xff]
    %v1624 = vld [vmem:[#allocation5 + $0xd0] sm:$0xff]
    %v1625 = vld [vmem:[#allocation5 + $0xd8] sm:$0xff]
    %v1626 = vld [vmem:[#allocation5 + $0xe0] sm:$0xff]
    %v1627 = vld [vmem:[#allocation5 + $0xe8] sm:$0xff]
    %v1628 = vld [vmem:[#allocation5 + $0xf0] sm:$0xff]
    %v1629 = vld [vmem:[#allocation5 + $0xf8] sm:$0xff]
    %v1630 = vld [vmem:[%s6] sm:$0x3]
    %v1632 = vlaneseq
    %v1633 = vshrl.u32 %v1632, 7
    %v1634 = vsub.s32 0, %v1633
    %v1635 = vrot.slane %v1630, %v1634
    %v1636 = vlaneseq
    %v1637 = vshrl.u32 %v1636, 7
    %v1638 = vsub.s32 1, %v1637
    %v1639 = vrot.slane %v1630, %v1638
    %v1674 = vunpack.c.l.b16 %v1598
    %v1675 = vunpack.c.h.b16 %v1598
    %v1676 = vunpack.c.l.b16 %v1599
    %v1677 = vunpack.c.h.b16 %v1599
    %v1678 = vunpack.c.l.b16 %v1600
    %v1679 = vunpack.c.h.b16 %v1600
    %v1680 = vunpack.c.l.b16 %v1601
    %v1681 = vunpack.c.h.b16 %v1601
    %v1682 = vunpack.c.l.b16 %v1602
    %v1683 = vunpack.c.h.b16 %v1602
    %v1684 = vunpack.c.l.b16 %v1603
    %v1685 = vunpack.c.h.b16 %v1603
    %v1686 = vunpack.c.l.b16 %v1604
    %v1687 = vunpack.c.h.b16 %v1604
    %v1688 = vunpack.c.l.b16 %v1605
    %v1689 = vunpack.c.h.b16 %v1605
    %v1690 = vunpack.c.l.b16 %v1606
    %v1691 = vunpack.c.h.b16 %v1606
    %v1692 = vunpack.c.l.b16 %v1607
    %v1693 = vunpack.c.h.b16 %v1607
    %v1694 = vunpack.c.l.b16 %v1608
    %v1695 = vunpack.c.h.b16 %v1608
    %v1696 = vunpack.c.l.b16 %v1609
    %v1697 = vunpack.c.h.b16 %v1609
    %v1698 = vunpack.c.l.b16 %v1610
    %v1699 = vunpack.c.h.b16 %v1610
    %v1700 = vunpack.c.l.b16 %v1611
    %v1701 = vunpack.c.h.b16 %v1611
    %v1702 = vunpack.c.l.b16 %v1612
    %v1703 = vunpack.c.h.b16 %v1612
    %v1704 = vunpack.c.l.b16 %v1613
    %v1705 = vunpack.c.h.b16 %v1613
    %v1706 = vunpack.c.l.b16 %v1614
    %v1707 = vunpack.c.h.b16 %v1614
    %v1708 = vunpack.c.l.b16 %v1615
    %v1709 = vunpack.c.h.b16 %v1615
    %v1710 = vunpack.c.l.b16 %v1616
    %v1711 = vunpack.c.h.b16 %v1616
    %v1712 = vunpack.c.l.b16 %v1617
    %v1713 = vunpack.c.h.b16 %v1617
    %v1714 = vunpack.c.l.b16 %v1618
    %v1715 = vunpack.c.h.b16 %v1618
    %v1716 = vunpack.c.l.b16 %v1619
    %v1717 = vunpack.c.h.b16 %v1619
    %v1718 = vunpack.c.l.b16 %v1620
    %v1719 = vunpack.c.h.b16 %v1620
    %v1720 = vunpack.c.l.b16 %v1621
    %v1721 = vunpack.c.h.b16 %v1621
    %v1722 = vunpack.c.l.b16 %v1622
    %v1723 = vunpack.c.h.b16 %v1622
    %v1724 = vunpack.c.l.b16 %v1623
    %v1725 = vunpack.c.h.b16 %v1623
    %v1726 = vunpack.c.l.b16 %v1624
    %v1727 = vunpack.c.h.b16 %v1624
    %v1728 = vunpack.c.l.b16 %v1625
    %v1729 = vunpack.c.h.b16 %v1625
    %v1730 = vunpack.c.l.b16 %v1626
    %v1731 = vunpack.c.h.b16 %v1626
    %v1732 = vunpack.c.l.b16 %v1627
    %v1733 = vunpack.c.h.b16 %v1627
    %v1734 = vunpack.c.l.b16 %v1628
    %v1735 = vunpack.c.h.b16 %v1628
    %v1736 = vunpack.c.l.b16 %v1629
    %v1737 = vunpack.c.h.b16 %v1629
    %v1738 = vpack.c.b16 %v1676, %v1674
    %v1739 = vpack.c.b16 %v1677, %v1675
    %v1740 = vpack.c.b16 %v1680, %v1678
    %v1741 = vpack.c.b16 %v1681, %v1679
    %v1742 = vpack.c.b16 %v1684, %v1682
    %v1743 = vpack.c.b16 %v1685, %v1683
    %v1744 = vpack.c.b16 %v1688, %v1686
    %v1745 = vpack.c.b16 %v1689, %v1687
    %v1746 = vpack.c.b16 %v1692, %v1690
    %v1747 = vpack.c.b16 %v1693, %v1691
    %v1748 = vpack.c.b16 %v1696, %v1694
    %v1749 = vpack.c.b16 %v1697, %v1695
    %v1750 = vpack.c.b16 %v1700, %v1698
    %v1751 = vpack.c.b16 %v1701, %v1699
    %v1752 = vpack.c.b16 %v1704, %v1702
    %v1753 = vpack.c.b16 %v1705, %v1703
    %v1754 = vpack.c.b16 %v1708, %v1706
    %v1755 = vpack.c.b16 %v1709, %v1707
    %v1756 = vpack.c.b16 %v1712, %v1710
    %v1757 = vpack.c.b16 %v1713, %v1711
    %v1758 = vpack.c.b16 %v1716, %v1714
    %v1759 = vpack.c.b16 %v1717, %v1715
    %v1760 = vpack.c.b16 %v1720, %v1718
    %v1761 = vpack.c.b16 %v1721, %v1719
    %v1762 = vpack.c.b16 %v1724, %v1722
    %v1763 = vpack.c.b16 %v1725, %v1723
    %v1764 = vpack.c.b16 %v1728, %v1726
    %v1765 = vpack.c.b16 %v1729, %v1727
    %v1766 = vpack.c.b16 %v1732, %v1730
    %v1767 = vpack.c.b16 %v1733, %v1731
    %v1768 = vpack.c.b16 %v1736, %v1734
    %v1769 = vpack.c.b16 %v1737, %v1735
    %1802 = vmatprep.subr.bf16.mxu0 %v1739
    %1803 = vmatpush1.bf16.msra.mxu0 %v1738
    %1804 = vmatprep.subr.bf16.mxu0 %v1741
    %1805 = vmatpush1.bf16.msra.mxu0 %v1740
    %1806 = vmatprep.subr.bf16.mxu0 %v1743
    %1807 = vmatpush1.bf16.msra.mxu0 %v1742
    %1808 = vmatprep.subr.bf16.mxu0 %v1745
    %1809 = vmatpush1.bf16.msra.mxu0 %v1744
    %1810 = vmatprep.subr.bf16.mxu0 %v1747
    %1811 = vmatpush1.bf16.msra.mxu0 %v1746
    %1812 = vmatprep.subr.bf16.mxu0 %v1749
    %1813 = vmatpush1.bf16.msra.mxu0 %v1748
    %1814 = vmatprep.subr.bf16.mxu0 %v1751
    %1815 = vmatpush1.bf16.msra.mxu0 %v1750
    %1816 = vmatprep.subr.bf16.mxu0 %v1753
    %1817 = vmatpush1.bf16.msra.mxu0 %v1752
    %1818 = vmatprep.subr.bf16.mxu0 %v1755
    %1819 = vmatpush1.bf16.msra.mxu0 %v1754
    %1820 = vmatprep.subr.bf16.mxu0 %v1757
    %1821 = vmatpush1.bf16.msra.mxu0 %v1756
    %1822 = vmatprep.subr.bf16.mxu0 %v1759
    %1823 = vmatpush1.bf16.msra.mxu0 %v1758
    %1824 = vmatprep.subr.bf16.mxu0 %v1761
    %1825 = vmatpush1.bf16.msra.mxu0 %v1760
    %1826 = vmatprep.subr.bf16.mxu0 %v1763
    %1827 = vmatpush1.bf16.msra.mxu0 %v1762
    %1828 = vmatprep.subr.bf16.mxu0 %v1765
    %1829 = vmatpush1.bf16.msra.mxu0 %v1764
    %1830 = vmatprep.subr.bf16.mxu0 %v1767
    %1831 = vmatpush1.bf16.msra.mxu0 %v1766
    %1832 = vmatprep.subr.bf16.mxu0 %v1769
    %1833 = vmatpush1.bf16.msra.mxu0 %v1768
    %1834 = vmatprep.mubr.bf16.mxu0 %v1575
    %1835 = vmatmul.mubr.bf16.gmra.mrb[0].mxu0 %v1574
    %v1836 = vpop.f32.mrb[0].mxu0
    %v1837 = vadd.f32 %v1635, %v1836
    %v1838 = vpop.f32.mrb[0].mxu0
    %v1839 = vadd.f32 %v1639, %v1838
    %v1840 = vpop.f32.mrb[0].mxu0
    %v1841 = vadd.f32 %v1635, %v1840
    %v1842 = vpop.f32.mrb[0].mxu0
    %v1843 = vadd.f32 %v1639, %v1842
    %1844 = vmatprep.mubr.bf16.mxu0 %v1577
    %1845 = vmatmul.mubr.bf16.gmra.mrb[0].mxu0 %v1576
    %v1846 = vpop.f32.mrb[0].mxu0
    %v1847 = vadd.f32 %v1635, %v1846
    %v1848 = vpop.f32.mrb[0].mxu0
    %v1849 = vadd.f32 %v1639, %v1848
    %v1850 = vpop.f32.mrb[0].mxu0
    %v1851 = vadd.f32 %v1635, %v1850
    %v1852 = vpop.f32.mrb[0].mxu0
    %v1853 = vadd.f32 %v1639, %v1852
    %1854 = vmatprep.mubr.bf16.mxu0 %v1579
    %1855 = vmatmul.mubr.bf16.gmra.mrb[0].mxu0 %v1578
    %v1856 = vpop.f32.mrb[0].mxu0
    %v1857 = vadd.f32 %v1635, %v1856
    %v1858 = vpop.f32.mrb[0].mxu0
    %v1859 = vadd.f32 %v1639, %v1858
    %v1860 = vpop.f32.mrb[0].mxu0
    %v1861 = vadd.f32 %v1635, %v1860
    %v1862 = vpop.f32.mrb[0].mxu0
    %v1863 = vadd.f32 %v1639, %v1862
    %1864 = vmatprep.mubr.bf16.mxu0 %v1581
    %1865 = vmatmul.mubr.bf16.gmra.mrb[0].mxu0 %v1580
    %v1866 = vpop.f32.mrb[0].mxu0
    %v1867 = vadd.f32 %v1635, %v1866
    %v1868 = vpop.f32.mrb[0].mxu0
    %v1869 = vadd.f32 %v1639, %v1868
    %v1870 = vpop.f32.mrb[0].mxu0
    %v1871 = vadd.f32 %v1635, %v1870
    %v1872 = vpop.f32.mrb[0].mxu0
    %v1873 = vadd.f32 %v1639, %v1872
    %1874 = vmatprep.mubr.bf16.mxu0 %v1583
    %1875 = vmatmul.mubr.bf16.gmra.mrb[0].mxu0 %v1582
    %v1876 = vpop.f32.mrb[0].mxu0
    %v1877 = vadd.f32 %v1635, %v1876
    %v1878 = vpop.f32.mrb[0].mxu0
    %v1879 = vadd.f32 %v1639, %v1878
    %v1880 = vpop.f32.mrb[0].mxu0
    %v1881 = vadd.f32 %v1635, %v1880
    %v1882 = vpop.f32.mrb[0].mxu0
    %v1883 = vadd.f32 %v1639, %v1882
    %1884 = vmatprep.mubr.bf16.mxu0 %v1585
    %1885 = vmatmul.mubr.bf16.gmra.mrb[0].mxu0 %v1584
    %v1886 = vpop.f32.mrb[0].mxu0
    %v1887 = vadd.f32 %v1635, %v1886
    %v1888 = vpop.f32.mrb[0].mxu0
    %v1889 = vadd.f32 %v1639, %v1888
    %v1890 = vpop.f32.mrb[0].mxu0
    %v1891 = vadd.f32 %v1635, %v1890
    %v1892 = vpop.f32.mrb[0].mxu0
    %v1893 = vadd.f32 %v1639, %v1892
    %1894 = vmatprep.mubr.bf16.mxu0 %v1587
    %1895 = vmatmul.mubr.bf16.gmra.mrb[0].mxu0 %v1586
    %v1896 = vpop.f32.mrb[0].mxu0
    %v1897 = vadd.f32 %v1635, %v1896
    %v1898 = vpop.f32.mrb[0].mxu0
    %v1899 = vadd.f32 %v1639, %v1898
    %v1900 = vpop.f32.mrb[0].mxu0
    %v1901 = vadd.f32 %v1635, %v1900
    %v1902 = vpop.f32.mrb[0].mxu0
    %v1903 = vadd.f32 %v1639, %v1902
    %1904 = vmatprep.mubr.bf16.mxu0 %v1589
    %1905 = vmatmul.mubr.bf16.gmra.mrb[0].mxu0 %v1588
    %v1906 = vpop.f32.mrb[0].mxu0
    %v1907 = vadd.f32 %v1635, %v1906
    %v1908 = vpop.f32.mrb[0].mxu0
    %v1909 = vadd.f32 %v1639, %v1908
    %v1910 = vpop.f32.mrb[0].mxu0
    %v1911 = vadd.f32 %v1635, %v1910
    %v1912 = vpop.f32.mrb[0].mxu0
    %v1913 = vadd.f32 %v1639, %v1912
    %1914 = vmatprep.mubr.bf16.mxu0 %v1591
    %1915 = vmatmul.mubr.bf16.gmra.mrb[0].mxu0 %v1590
    %v1916 = vpop.f32.mrb[0].mxu0
    %v1917 = vadd.f32 %v1635, %v1916
    %v1918 = vpop.f32.mrb[0].mxu0
    %v1919 = vadd.f32 %v1639, %v1918
    %v1920 = vpop.f32.mrb[0].mxu0
    %v1921 = vadd.f32 %v1635, %v1920
    %v1922 = vpop.f32.mrb[0].mxu0
    %v1923 = vadd.f32 %v1639, %v1922
    %1924 = vmatprep.mubr.bf16.mxu0 %v1593
    %1925 = vmatmul.mubr.bf16.gmra.mrb[0].mxu0 %v1592
    %v1926 = vpop.f32.mrb[0].mxu0
    %v1927 = vadd.f32 %v1635, %v1926
    %v1928 = vpop.f32.mrb[0].mxu0
    %v1929 = vadd.f32 %v1639, %v1928
    %v1930 = vpop.f32.mrb[0].mxu0
    %v1931 = vadd.f32 %v1635, %v1930
    %v1932 = vpop.f32.mrb[0].mxu0
    %v1933 = vadd.f32 %v1639, %v1932
    %1934 = vmatprep.mubr.bf16.mxu0 %v1595
    %1935 = vmatmul.mubr.bf16.gmra.mrb[0].mxu0 %v1594
    %v1936 = vpop.f32.mrb[0].mxu0
    %v1937 = vadd.f32 %v1635, %v1936
    %v1938 = vpop.f32.mrb[0].mxu0
    %v1939 = vadd.f32 %v1639, %v1938
    %v1940 = vpop.f32.mrb[0].mxu0
    %v1941 = vadd.f32 %v1635, %v1940
    %v1942 = vpop.f32.mrb[0].mxu0
    %v1943 = vadd.f32 %v1639, %v1942
    %1944 = vmatprep.mubr.bf16.mxu0 %v1597
    %1945 = vmatmul.mubr.bf16.gmra.mrb[0].mxu0 %v1596
    %v1946 = vpop.f32.mrb[0].mxu0
    %v1947 = vadd.f32 %v1635, %v1946
    %v1948 = vpop.f32.mrb[0].mxu0
    %v1949 = vadd.f32 %v1639, %v1948
    %v1950 = vpop.f32.mrb[0].mxu0
    %v1951 = vadd.f32 %v1635, %v1950
    %v1952 = vpop.f32.mrb[0].mxu0
    %v1953 = vadd.f32 %v1639, %v1952
    %1954 = vdwg.mxu0
    %v1955 = vpack.c.bf16 %v1841, %v1837
    %v1956 = vpack.c.bf16 %v1843, %v1839
    %v1957 = vpack.c.bf16 %v1851, %v1847
    %v1958 = vpack.c.bf16 %v1853, %v1849
    %v1959 = vpack.c.bf16 %v1861, %v1857
    %v1960 = vpack.c.bf16 %v1863, %v1859
    %v1961 = vpack.c.bf16 %v1871, %v1867
    %v1962 = vpack.c.bf16 %v1873, %v1869
    %v1963 = vpack.c.bf16 %v1881, %v1877
    %v1964 = vpack.c.bf16 %v1883, %v1879
    %v1965 = vpack.c.bf16 %v1891, %v1887
    %v1966 = vpack.c.bf16 %v1893, %v1889
    %v1967 = vpack.c.bf16 %v1901, %v1897
    %v1968 = vpack.c.bf16 %v1903, %v1899
    %v1969 = vpack.c.bf16 %v1911, %v1907
    %v1970 = vpack.c.bf16 %v1913, %v1909
    %v1971 = vpack.c.bf16 %v1921, %v1917
    %v1972 = vpack.c.bf16 %v1923, %v1919
    %v1973 = vpack.c.bf16 %v1931, %v1927
    %v1974 = vpack.c.bf16 %v1933, %v1929
    %v1975 = vpack.c.bf16 %v1941, %v1937
    %v1976 = vpack.c.bf16 %v1943, %v1939
    %v1977 = vpack.c.bf16 %v1951, %v1947
    %v1978 = vpack.c.bf16 %v1953, %v1949
    %1979 = vmatprep.subr.bf16.mxu0 %v1956
    %1980 = vmatpush1.bf16.msra.mxu0 %v1955
    %1981 = vmatprep.subr.bf16.mxu0 %v1958
    %1982 = vmatpush1.bf16.msra.mxu0 %v1957
    %1983 = vmatprep.subr.bf16.mxu0 %v1960
    %1984 = vmatpush1.bf16.msra.mxu0 %v1959
    %1985 = vmatprep.subr.bf16.mxu0 %v1962
    %1986 = vmatpush1.bf16.msra.mxu0 %v1961
    %1987 = vmatprep.subr.bf16.mxu0 %v1964
    %1988 = vmatpush1.bf16.msra.mxu0 %v1963
    %1989 = vmatprep.subr.bf16.mxu0 %v1966
    %1990 = vmatpush1.bf16.msra.mxu0 %v1965
    %1991 = vmatprep.subr.bf16.mxu0 %v1968
    %1992 = vmatpush1.bf16.msra.mxu0 %v1967
    %1993 = vmatprep.subr.bf16.mxu0 %v1970
    %1994 = vmatpush1.bf16.msra.mxu0 %v1969
    %1995 = vmatprep.subr.bf16.mxu0 %v1972
    %1996 = vmatpush1.bf16.msra.mxu0 %v1971
    %1997 = vmatprep.subr.bf16.mxu0 %v1974
    %1998 = vmatpush1.bf16.msra.mxu0 %v1973
    %1999 = vmatprep.subr.bf16.mxu0 %v1976
    %2000 = vmatpush1.bf16.msra.mxu0 %v1975
    %2001 = vmatprep.subr.bf16.mxu0 %v1978
    %2002 = vmatpush1.bf16.msra.mxu0 %v1977
    %2003 = vmatprep.subr.bf16.mxu0 0
    %2004 = vmatpush1.bf16.msra.mxu0 0
    %2005 = vmatprep.subr.bf16.mxu0 0
    %2006 = vmatpush1.bf16.msra.mxu0 0
    %2007 = vmatprep.subr.bf16.mxu0 0
    %2008 = vmatpush1.bf16.msra.mxu0 0
    %2009 = vmatprep.subr.bf16.mxu0 0
    %2010 = vmatpush1.bf16.msra.mxu0 0
    %2011 = vmatprep.mubr.bf16.mxu0 %v1338
    %2012 = vmatmul.mubr.bf16.gmra.mrb[0].mxu0 %v1300
    %v2013 = vpop.f32.mrb[0].mxu0
    %v2014 = vadd.f32 0.0, %v2013
    %v2015 = vpop.f32.mrb[0].mxu0
    %v2016 = vadd.f32 0.0, %v2015
    %v2017 = vpop.f32.mrb[0].mxu0
    %v2018 = vadd.f32 0.0, %v2017
    %v2019 = vpop.f32.mrb[0].mxu0
    %v2020 = vadd.f32 0.0, %v2019
    %2021 = vmatprep.mubr.bf16.mxu0 %v1341
    %2022 = vmatmul.mubr.bf16.gmra.mrb[0].mxu0 %v1302
    %v2023 = vpop.f32.mrb[0].mxu0
    %v2024 = vadd.f32 0.0, %v2023
    %v2025 = vpop.f32.mrb[0].mxu0
    %v2026 = vadd.f32 0.0, %v2025
    %v2027 = vpop.f32.mrb[0].mxu0
    %v2028 = vadd.f32 0.0, %v2027
    %v2029 = vpop.f32.mrb[0].mxu0
    %v2030 = vadd.f32 0.0, %v2029
    %2031 = vmatprep.mubr.bf16.mxu0 %v1344
    %2032 = vmatmul.mubr.bf16.gmra.mrb[0].mxu0 %v1304
    %v2033 = vpop.f32.mrb[0].mxu0
    %v2034 = vadd.f32 0.0, %v2033
    %v2035 = vpop.f32.mrb[0].mxu0
    %v2036 = vadd.f32 0.0, %v2035
    %v2037 = vpop.f32.mrb[0].mxu0
    %v2038 = vadd.f32 0.0, %v2037
    %v2039 = vpop.f32.mrb[0].mxu0
    %v2040 = vadd.f32 0.0, %v2039
    %2041 = vmatprep.mubr.bf16.mxu0 %v1347
    %2042 = vmatmul.mubr.bf16.gmra.mrb[0].mxu0 %v1306
    %v2043 = vpop.f32.mrb[0].mxu0
    %v2044 = vadd.f32 0.0, %v2043
    %v2045 = vpop.f32.mrb[0].mxu0
    %v2046 = vadd.f32 0.0, %v2045
    %v2047 = vpop.f32.mrb[0].mxu0
    %v2048 = vadd.f32 0.0, %v2047
    %v2049 = vpop.f32.mrb[0].mxu0
    %v2050 = vadd.f32 0.0, %v2049
    %2051 = vmatprep.mubr.bf16.mxu0 %v1350
    %2052 = vmatmul.mubr.bf16.gmra.mrb[0].mxu0 %v1308
    %v2053 = vpop.f32.mrb[0].mxu0
    %v2054 = vadd.f32 0.0, %v2053
    %v2055 = vpop.f32.mrb[0].mxu0
    %v2056 = vadd.f32 0.0, %v2055
    %v2057 = vpop.f32.mrb[0].mxu0
    %v2058 = vadd.f32 0.0, %v2057
    %v2059 = vpop.f32.mrb[0].mxu0
    %v2060 = vadd.f32 0.0, %v2059
    %2061 = vmatprep.mubr.bf16.mxu0 %v1353
    %2062 = vmatmul.mubr.bf16.gmra.mrb[0].mxu0 %v1310
    %v2063 = vpop.f32.mrb[0].mxu0
    %v2064 = vadd.f32 0.0, %v2063
    %v2065 = vpop.f32.mrb[0].mxu0
    %v2066 = vadd.f32 0.0, %v2065
    %v2067 = vpop.f32.mrb[0].mxu0
    %v2068 = vadd.f32 0.0, %v2067
    %v2069 = vpop.f32.mrb[0].mxu0
    %v2070 = vadd.f32 0.0, %v2069
    %2071 = vmatprep.mubr.bf16.mxu0 %v1356
    %2072 = vmatmul.mubr.bf16.gmra.mrb[0].mxu0 %v1312
    %v2073 = vpop.f32.mrb[0].mxu0
    %v2074 = vadd.f32 0.0, %v2073
    %v2075 = vpop.f32.mrb[0].mxu0
    %v2076 = vadd.f32 0.0, %v2075
    %v2077 = vpop.f32.mrb[0].mxu0
    %v2078 = vadd.f32 0.0, %v2077
    %v2079 = vpop.f32.mrb[0].mxu0
    %v2080 = vadd.f32 0.0, %v2079
    %2081 = vmatprep.mubr.bf16.mxu0 %v1359
    %2082 = vmatmul.mubr.bf16.gmra.mrb[0].mxu0 %v1314
    %v2083 = vpop.f32.mrb[0].mxu0
    %v2084 = vadd.f32 0.0, %v2083
    %v2085 = vpop.f32.mrb[0].mxu0
    %v2086 = vadd.f32 0.0, %v2085
    %v2087 = vpop.f32.mrb[0].mxu0
    %v2088 = vadd.f32 0.0, %v2087
    %v2089 = vpop.f32.mrb[0].mxu0
    %v2090 = vadd.f32 0.0, %v2089
    %2091 = vmatprep.mubr.bf16.mxu0 %v1362
    %2092 = vmatmul.mubr.bf16.gmra.mrb[0].mxu0 %v1316
    %v2093 = vpop.f32.mrb[0].mxu0
    %v2094 = vadd.f32 0.0, %v2093
    %v2095 = vpop.f32.mrb[0].mxu0
    %v2096 = vadd.f32 0.0, %v2095
    %v2097 = vpop.f32.mrb[0].mxu0
    %v2098 = vadd.f32 0.0, %v2097
    %v2099 = vpop.f32.mrb[0].mxu0
    %v2100 = vadd.f32 0.0, %v2099
    %2101 = vmatprep.mubr.bf16.mxu0 %v1365
    %2102 = vmatmul.mubr.bf16.gmra.mrb[0].mxu0 %v1318
    %v2103 = vpop.f32.mrb[0].mxu0
    %v2104 = vadd.f32 0.0, %v2103
    %v2105 = vpop.f32.mrb[0].mxu0
    %v2106 = vadd.f32 0.0, %v2105
    %v2107 = vpop.f32.mrb[0].mxu0
    %v2108 = vadd.f32 0.0, %v2107
    %v2109 = vpop.f32.mrb[0].mxu0
    %v2110 = vadd.f32 0.0, %v2109
    %2111 = vmatprep.mubr.bf16.mxu0 %v1368
    %2112 = vmatmul.mubr.bf16.gmra.mrb[0].mxu0 %v1320
    %v2113 = vpop.f32.mrb[0].mxu0
    %v2114 = vadd.f32 0.0, %v2113
    %v2115 = vpop.f32.mrb[0].mxu0
    %v2116 = vadd.f32 0.0, %v2115
    %v2117 = vpop.f32.mrb[0].mxu0
    %v2118 = vadd.f32 0.0, %v2117
    %v2119 = vpop.f32.mrb[0].mxu0
    %v2120 = vadd.f32 0.0, %v2119
    %2121 = vmatprep.mubr.bf16.mxu0 %v1371
    %2122 = vmatmul.mubr.bf16.gmra.mrb[0].mxu0 %v1322
    %v2123 = vpop.f32.mrb[0].mxu0
    %v2124 = vadd.f32 0.0, %v2123
    %v2125 = vpop.f32.mrb[0].mxu0
    %v2126 = vadd.f32 0.0, %v2125
    %v2127 = vpop.f32.mrb[0].mxu0
    %v2128 = vadd.f32 0.0, %v2127
    %v2129 = vpop.f32.mrb[0].mxu0
    %v2130 = vadd.f32 0.0, %v2129
    %2131 = vdwg.mxu0
    %v2132 = vmax.f32 %v2014, 0.0
    %v2133 = vmax.f32 %v2016, 0.0
    %v2134 = vmax.f32 %v2018, 0.0
    %v2135 = vmax.f32 %v2020, 0.0
    %v2136 = vmax.f32 %v2024, 0.0
    %v2137 = vmax.f32 %v2026, 0.0
    %v2138 = vmax.f32 %v2028, 0.0
    %v2139 = vmax.f32 %v2030, 0.0
    %v2140 = vmax.f32 %v2034, 0.0
    %v2141 = vmax.f32 %v2036, 0.0
    %v2142 = vmax.f32 %v2038, 0.0
    %v2143 = vmax.f32 %v2040, 0.0
    %v2144 = vmax.f32 %v2044, 0.0
    %v2145 = vmax.f32 %v2046, 0.0
    %v2146 = vmax.f32 %v2048, 0.0
    %v2147 = vmax.f32 %v2050, 0.0
    %v2148 = vmax.f32 %v2054, 0.0
    %v2149 = vmax.f32 %v2056, 0.0
    %v2150 = vmax.f32 %v2058, 0.0
    %v2151 = vmax.f32 %v2060, 0.0
    %v2152 = vmax.f32 %v2064, 0.0
    %v2153 = vmax.f32 %v2066, 0.0
    %v2154 = vmax.f32 %v2068, 0.0
    %v2155 = vmax.f32 %v2070, 0.0
    %v2156 = vmax.f32 %v2074, 0.0
    %v2157 = vmax.f32 %v2076, 0.0
    %v2158 = vmax.f32 %v2078, 0.0
    %v2159 = vmax.f32 %v2080, 0.0
    %v2160 = vmax.f32 %v2084, 0.0
    %v2161 = vmax.f32 %v2086, 0.0
    %v2162 = vmax.f32 %v2088, 0.0
    %v2163 = vmax.f32 %v2090, 0.0
    %v2164 = vmax.f32 %v2094, 0.0
    %v2165 = vmax.f32 %v2096, 0.0
    %v2166 = vmax.f32 %v2098, 0.0
    %v2167 = vmax.f32 %v2100, 0.0
    %v2168 = vmax.f32 %v2104, 0.0
    %v2169 = vmax.f32 %v2106, 0.0
    %v2170 = vmax.f32 %v2108, 0.0
    %v2171 = vmax.f32 %v2110, 0.0
    %v2172 = vmax.f32 %v2114, 0.0
    %v2173 = vmax.f32 %v2116, 0.0
    %v2174 = vmax.f32 %v2118, 0.0
    %v2175 = vmax.f32 %v2120, 0.0
    %v2176 = vmax.f32 %v2124, 0.0
    %v2177 = vmax.f32 %v2126, 0.0
    %v2178 = vmax.f32 %v2128, 0.0
    %v2179 = vmax.f32 %v2130, 0.0
    %2180 = vst [vmem:[#allocation7] sm:$0xff] %v2132
    %2181 = vst [vmem:[#allocation7 + $0x8] sm:$0xff] %v2133
    %2182 = vst [vmem:[#allocation7 + $0x10] sm:$0xff] %v2134
    %2183 = vst [vmem:[#allocation7 + $0x18] sm:$0xff] %v2135
    %2184 = vst [vmem:[#allocation7 + $0x20] sm:$0xff] %v2136
    %2185 = vst [vmem:[#allocation7 + $0x28] sm:$0xff] %v2137
    %2186 = vst [vmem:[#allocation7 + $0x30] sm:$0xff] %v2138
    %2187 = vst [vmem:[#allocation7 + $0x38] sm:$0xff] %v2139
    %2188 = vst [vmem:[#allocation7 + $0x40] sm:$0xff] %v2140
    %2189 = vst [vmem:[#allocation7 + $0x48] sm:$0xff] %v2141
    %2190 = vst [vmem:[#allocation7 + $0x50] sm:$0xff] %v2142
    %2191 = vst [vmem:[#allocation7 + $0x58] sm:$0xff] %v2143
    %2192 = vst [vmem:[#allocation7 + $0x60] sm:$0xff] %v2144
    %2193 = vst [vmem:[#allocation7 + $0x68] sm:$0xff] %v2145
    %2194 = vst [vmem:[#allocation7 + $0x70] sm:$0xff] %v2146
    %2195 = vst [vmem:[#allocation7 + $0x78] sm:$0xff] %v2147
    %2196 = vst [vmem:[#allocation7 + $0x80] sm:$0xff] %v2148
    %2197 = vst [vmem:[#allocation7 + $0x88] sm:$0xff] %v2149
    %2198 = vst [vmem:[#allocation7 + $0x90] sm:$0xff] %v2150
    %2199 = vst [vmem:[#allocation7 + $0x98] sm:$0xff] %v2151
    %2200 = vst [vmem:[#allocation7 + $0xa0] sm:$0xff] %v2152
    %2201 = vst [vmem:[#allocation7 + $0xa8] sm:$0xff] %v2153
    %2202 = vst [vmem:[#allocation7 + $0xb0] sm:$0xff] %v2154
    %2203 = vst [vmem:[#allocation7 + $0xb8] sm:$0xff] %v2155
    %2204 = vst [vmem:[#allocation7 + $0xc0] sm:$0xff] %v2156
    %2205 = vst [vmem:[#allocation7 + $0xc8] sm:$0xff] %v2157
    %2206 = vst [vmem:[#allocation7 + $0xd0] sm:$0xff] %v2158
    %2207 = vst [vmem:[#allocation7 + $0xd8] sm:$0xff] %v2159
    %2208 = vst [vmem:[#allocation7 + $0xe0] sm:$0xff] %v2160
    %2209 = vst [vmem:[#allocation7 + $0xe8] sm:$0xff] %v2161
    %2210 = vst [vmem:[#allocation7 + $0xf0] sm:$0xff] %v2162
    %2211 = vst [vmem:[#allocation7 + $0xf8] sm:$0xff] %v2163
    %2212 = vst [vmem:[#allocation7 + $0x100] sm:$0xff] %v2164
    %2213 = vst [vmem:[#allocation7 + $0x108] sm:$0xff] %v2165
    %2214 = vst [vmem:[#allocation7 + $0x110] sm:$0xff] %v2166
    %2215 = vst [vmem:[#allocation7 + $0x118] sm:$0xff] %v2167
    %2216 = vst [vmem:[#allocation7 + $0x120] sm:$0xff] %v2168
    %2217 = vst [vmem:[#allocation7 + $0x128] sm:$0xff] %v2169
    %2218 = vst [vmem:[#allocation7 + $0x130] sm:$0xff] %v2170
    %2219 = vst [vmem:[#allocation7 + $0x138] sm:$0xff] %v2171
    %2220 = vst [vmem:[#allocation7 + $0x140] sm:$0xff] %v2172
    %2221 = vst [vmem:[#allocation7 + $0x148] sm:$0xff] %v2173
    %2222 = vst [vmem:[#allocation7 + $0x150] sm:$0xff] %v2174
    %2223 = vst [vmem:[#allocation7 + $0x158] sm:$0xff] %v2175
    %2224 = vst [vmem:[#allocation7 + $0x160] sm:$0xff] %v2176
    %2225 = vst [vmem:[#allocation7 + $0x168] sm:$0xff] %v2177
    %2226 = vst [vmem:[#allocation7 + $0x170] sm:$0xff] %v2178
    %2227 = vst [vmem:[#allocation7 + $0x178] sm:$0xff] %v2179
    // Predicated region
    $region42: #{tpu_custom_call.1} parent=1 // pred_check
      _
    $region43: #{tpu_custom_call.1} parent=1 // pred_check_branch
      %2229 = sbr.rel (0) target = $region45
    $region44: #{tpu_custom_call.1} parent=1 // pred_region
      %s2231 = ssub.s32 6144, 6144
      %2232 = vsyncadd [#allocation4], %s2231
      %s2233 = sshll.u32 [#allocation7], 4
      %s2234 = int_to_ptr.vmem [resolvable:$true] %s2233
      %2239 = dma.vmem_to_hbm [thread:$0]  %s2234, 6144, %s8, [#allocation4], 256, 256, 16
    $region45: #{tpu_custom_call.1} parent=1 // pred_fallthru
      _
    // Predicated region
    $region46: #{tpu_custom_call.1} parent=1 // pred_check
      _
    $region47: #{tpu_custom_call.1} parent=1 // pred_check_branch
      %2241 = sbr.rel (0) target = $region49
    $region48: #{tpu_custom_call.1} parent=1 // pred_region
      %2242 = dma.done [#allocation4], 6144
    $region49: #{tpu_custom_call.1} parent=1 // pred_fallthru
      _
    %2243 = vsyncpa [#allocation3], 1
    %2244 = vsyncpa [#allocation6], 1
    %2245 = vsyncpa [#allocation4], 1

</llo_original>
